<compile_context>
chip_gen: v7x
topology: tpu7x:2x2x1
jax: 0.10.0
libtpu: 0.0.40
codegen_flags: <defaults>
</compile_context>

<pallas_src>
import jax
import jax.numpy as jnp
from jax.experimental import pallas as pl
from jax.experimental.pallas import tpu as pltpu

INPUT_DIM = 32
HIDDEN1 = 256
HIDDEN2 = 512
OUTPUT_DIM = 64
N_PAD = 128  # fc3 output padded 64 -> 128 so the output store is lane-dense


def _round_up(n, m):
    return ((n + m - 1) // m) * m


def decoder_kernel(x_ref, w1_ref, b1_ref, w2_ref, b2_ref, w3_ref, b3_ref, o_ref):
    # fc1 + ReLU  (bf16 operands, f32 accumulation; elementwise math in f32)
    x = x_ref[...].astype(jnp.bfloat16)
    h1 = jnp.dot(x, w1_ref[...], preferred_element_type=jnp.float32)
    h1 = jnp.maximum(h1 + b1_ref[...], 0.0)
    # fc2 + ReLU
    h2 = jnp.dot(h1.astype(jnp.bfloat16), w2_ref[...],
                 preferred_element_type=jnp.float32)
    h2 = jnp.maximum(h2 + b2_ref[...], 0.0)
    # fc3 (no activation); output block is lane-dense (N_PAD = 128)
    out = jnp.dot(h2.astype(jnp.bfloat16), w3_ref[...],
                  preferred_element_type=jnp.float32)
    o_ref[...] = (out + b3_ref[...]).astype(o_ref.dtype)


def _in_specs(tb, use_buffered):
    """x tile indexed by the batch grid step; weights/biases VMEM-resident."""
    kw = {"pipeline_mode": pl.Buffered(1)} if use_buffered else {}

    def resident(shape):
        return pl.BlockSpec(shape, lambda i: (0, 0), **kw)

    return [
        pl.BlockSpec((tb, INPUT_DIM), lambda i: (i, 0)),  # x tile (unpadded K)
        resident((INPUT_DIM, HIDDEN1)),                   # w1
        resident((1, HIDDEN1)),                           # b1
        resident((HIDDEN1, HIDDEN2)),                     # w2
        resident((1, HIDDEN2)),                           # b2
        resident((HIDDEN2, N_PAD)),                       # w3 (N padded to 128)
        resident((1, N_PAD)),                             # b3
    ]


def decoder_forward(x, params, *, tb=None, slice_output=True):
    """x: (B, INPUT_DIM) f32.  params: bf16 weights / f32 biases (init_params).

    With slice_output=False the padded (b_pad, 128) f32 buffer is returned
    directly (columns >= OUTPUT_DIM are zero), avoiding the extra XLA copy
    that narrows the lane-dense output.
    """
    w1, b1, w2, b2, w3, b3 = params
    B = x.shape[0]

    if tb is None:
        b8 = _round_up(B, 8)
        # >=2 grid steps (v7x dual-TC), capped at 512 rows per tile.
        tb = min(512, max(8, _round_up(pl.cdiv(b8, 2), 8)))
    b_pad = _round_up(B, tb)
    grid = (b_pad // tb,)

    # Only pad the batch axis, and only when it is not already tile-aligned.
    x_p = x if b_pad == B else jnp.pad(x, ((0, b_pad - B), (0, 0)))

    flops = 2 * b_pad * (INPUT_DIM * HIDDEN1 + HIDDEN1 * HIDDEN2 + HIDDEN2 * N_PAD)
    weight_bytes = (2 * (INPUT_DIM * HIDDEN1 + HIDDEN1 * HIDDEN2 + HIDDEN2 * N_PAD)
                    + 4 * (HIDDEN1 + HIDDEN2 + N_PAD))
    bytes_accessed = weight_bytes + 4 * b_pad * (INPUT_DIM + N_PAD)

    def run(use_buffered):
        return pl.pallas_call(
            decoder_kernel,
            out_shape=jax.ShapeDtypeStruct((b_pad, N_PAD), jnp.float32),
            grid=grid,
            in_specs=_in_specs(tb, use_buffered),
            out_specs=pl.BlockSpec((tb, N_PAD), lambda i: (i, 0)),
            compiler_params=pltpu.CompilerParams(
                dimension_semantics=("parallel",)),
            cost_estimate=pl.CostEstimate(
                flops=flops, transcendentals=0, bytes_accessed=bytes_accessed),
        )(x_p, w1, b1, w2, b2, w3, b3)

    try:
        out = run(True)
    except Exception:
        # Fallback for JAX builds without BlockSpec(pipeline_mode=Buffered(1)).
        out = run(False)

    if slice_output:
        return out[:B, :OUTPUT_DIM]
    return out


def init_params(key):
    """Deterministic init mimicking PyTorch nn.Linear (uniform +/- 1/sqrt(fan_in)).

    Weights are stored (in, out) in bf16 so the hot path is x @ W + b on the
    bf16 MXU datapath; biases stay f32.  w3/b3 are zero-padded along output
    columns (64 -> 128); the zero padding contributes nothing, so semantics
    match nn.Linear exactly.
    """
    def linear(key, fan_in, fan_out):
        kw, kb = jax.random.split(key)
        bound = 1.0 / jnp.sqrt(fan_in)
        w = jax.random.uniform(kw, (fan_in, fan_out), jnp.float32, -bound, bound)
        b = jax.random.uniform(kb, (1, fan_out), jnp.float32, -bound, bound)
        return w, b

    k1, k2, k3 = jax.random.split(key, 3)
    w1, b1 = linear(k1, INPUT_DIM, HIDDEN1)
    w2, b2 = linear(k2, HIDDEN1, HIDDEN2)
    w3, b3 = linear(k3, HIDDEN2, OUTPUT_DIM)

    w3_p = jnp.zeros((HIDDEN2, N_PAD), jnp.float32).at[:, :OUTPUT_DIM].set(w3)
    b3_p = jnp.zeros((1, N_PAD), jnp.float32).at[:, :OUTPUT_DIM].set(b3)

    return (w1.astype(jnp.bfloat16), b1,
            w2.astype(jnp.bfloat16), b2,
            w3_p.astype(jnp.bfloat16), b3_p)


def reference_forward(x, params):
    """Pure-JAX reference applying the same bf16-operand / f32-accumulate math."""
    w1, b1, w2, b2, w3, b3 = params
    bf = jnp.bfloat16
    h1 = jnp.maximum(
        jnp.dot(x.astype(bf), w1, preferred_element_type=jnp.float32) + b1, 0.0)
    h2 = jnp.maximum(
        jnp.dot(h1.astype(bf), w2, preferred_element_type=jnp.float32) + b2, 0.0)
    out = jnp.dot(h2.astype(bf), w3, preferred_element_type=jnp.float32) + b3
    return out[:, :OUTPUT_DIM]


if __name__ == "__main__":
    key = jax.random.PRNGKey(0)
    k_x, k_p = jax.random.split(key)

    B = 16
    x = jax.random.normal(k_x, (B, INPUT_DIM), jnp.float32)
    params = init_params(k_p)

    # Default tb at B=16 -> 8 rows/tile, grid=(2,): exercises the batch grid,
    # pipelining, and (on v7x) the dual-TensorCore split.
    out = decoder_forward(x, params)
    out = jax.block_until_ready(out)

    ref = reference_forward(x, params)
    assert out.shape == (B, OUTPUT_DIM)
    # bf16 operands -> tolerance loosened vs the old pure-f32 1e-5 check.
    assert jnp.allclose(out, ref, atol=1e-2, rtol=1e-2), "mismatch vs reference"

    print("KERNEL_OK")
</pallas_src>

<mosaic_0001>
module attributes {stable_mosaic.version = 11 : i64} {
  func.func @decoder_kernel(%arg0: i32, %arg1: memref<8x32xf32, #tpu.memory_space<vmem>>, %arg2: memref<32x256xbf16, #tpu.memory_space<vmem>>, %arg3: memref<1x256xf32, #tpu.memory_space<vmem>>, %arg4: memref<256x512xbf16, #tpu.memory_space<vmem>>, %arg5: memref<1x512xf32, #tpu.memory_space<vmem>>, %arg6: memref<512x128xbf16, #tpu.memory_space<vmem>>, %arg7: memref<1x128xf32, #tpu.memory_space<vmem>>, %arg8: memref<8x128xf32, #tpu.memory_space<vmem>>) attributes {dimension_semantics = [#tpu.dimension_semantics<parallel>], iteration_bounds = array<i64: 2>, scalar_prefetch = 0 : i64, scratch_operands = 0 : i64, tpu.core_type = #tpu.core_type<tc>, window_params = [{transform_indices = @transform_0, window_bounds = array<i64: 8, 32>}, {pipeline_mode = #tpu.pipeline_mode<synchronous>, transform_indices = @transform_1, window_bounds = array<i64: 32, 256>}, {pipeline_mode = #tpu.pipeline_mode<synchronous>, transform_indices = @transform_2, window_bounds = array<i64: 1, 256>}, {pipeline_mode = #tpu.pipeline_mode<synchronous>, transform_indices = @transform_3, window_bounds = array<i64: 256, 512>}, {pipeline_mode = #tpu.pipeline_mode<synchronous>, transform_indices = @transform_4, window_bounds = array<i64: 1, 512>}, {pipeline_mode = #tpu.pipeline_mode<synchronous>, transform_indices = @transform_5, window_bounds = array<i64: 512, 128>}, {pipeline_mode = #tpu.pipeline_mode<synchronous>, transform_indices = @transform_6, window_bounds = array<i64: 1, 128>}, {transform_indices = @transform_7, window_bounds = array<i64: 8, 128>}]} {
    %c0 = arith.constant 0 : index
    %c0_0 = arith.constant 0 : index
    %0 = vector.load %arg1[%c0, %c0_0] : memref<8x32xf32, #tpu.memory_space<vmem>>, vector<8x32xf32>
    %1 = arith.truncf %0 : vector<8x32xf32> to vector<8x32xbf16>
    %c0_1 = arith.constant 0 : index
    %c0_2 = arith.constant 0 : index
    %2 = vector.load %arg2[%c0_1, %c0_2] : memref<32x256xbf16, #tpu.memory_space<vmem>>, vector<32x256xbf16>
    %cst = arith.constant dense<0.000000e+00> : vector<8x256xf32>
    %3 = tpu.matmul %1, %2, %cst {dimension_numbers = #tpu.dot_dimension_numbers<[1], [0], [0], [1], [0, 0, 1, 1], [], []>} : vector<8x32xbf16>, vector<32x256xbf16>, vector<8x256xf32> -> vector<8x256xf32>
    %c0_3 = arith.constant 0 : index
    %c0_4 = arith.constant 0 : index
    %4 = vector.load %arg3[%c0_3, %c0_4] : memref<1x256xf32, #tpu.memory_space<vmem>>, vector<1x256xf32>
    %5 = vector.broadcast %4 : vector<1x256xf32> to vector<8x256xf32>
    %6 = arith.addf %3, %5 : vector<8x256xf32>
    %cst_5 = arith.constant 0.000000e+00 : f32
    %7 = vector.broadcast %cst_5 : f32 to vector<8x256xf32>
    %8 = arith.maximumf %6, %7 : vector<8x256xf32>
    %9 = arith.truncf %8 : vector<8x256xf32> to vector<8x256xbf16>
    %c0_6 = arith.constant 0 : index
    %c0_7 = arith.constant 0 : index
    %10 = vector.load %arg4[%c0_6, %c0_7] : memref<256x512xbf16, #tpu.memory_space<vmem>>, vector<256x512xbf16>
    %cst_8 = arith.constant dense<0.000000e+00> : vector<8x512xf32>
    %11 = tpu.matmul %9, %10, %cst_8 {dimension_numbers = #tpu.dot_dimension_numbers<[1], [0], [0], [1], [0, 0, 1, 1], [], []>} : vector<8x256xbf16>, vector<256x512xbf16>, vector<8x512xf32> -> vector<8x512xf32>
    %c0_9 = arith.constant 0 : index
    %c0_10 = arith.constant 0 : index
    %12 = vector.load %arg5[%c0_9, %c0_10] : memref<1x512xf32, #tpu.memory_space<vmem>>, vector<1x512xf32>
    %13 = vector.broadcast %12 : vector<1x512xf32> to vector<8x512xf32>
    %14 = arith.addf %11, %13 : vector<8x512xf32>
    %cst_11 = arith.constant 0.000000e+00 : f32
    %15 = vector.broadcast %cst_11 : f32 to vector<8x512xf32>
    %16 = arith.maximumf %14, %15 : vector<8x512xf32>
    %17 = arith.truncf %16 : vector<8x512xf32> to vector<8x512xbf16>
    %c0_12 = arith.constant 0 : index
    %c0_13 = arith.constant 0 : index
    %18 = vector.load %arg6[%c0_12, %c0_13] : memref<512x128xbf16, #tpu.memory_space<vmem>>, vector<512x128xbf16>
    %cst_14 = arith.constant dense<0.000000e+00> : vector<8x128xf32>
    %19 = tpu.matmul %17, %18, %cst_14 {dimension_numbers = #tpu.dot_dimension_numbers<[1], [0], [0], [1], [0, 0, 1, 1], [], []>} : vector<8x512xbf16>, vector<512x128xbf16>, vector<8x128xf32> -> vector<8x128xf32>
    %c0_15 = arith.constant 0 : index
    %c0_16 = arith.constant 0 : index
    %20 = vector.load %arg7[%c0_15, %c0_16] : memref<1x128xf32, #tpu.memory_space<vmem>>, vector<1x128xf32>
    %21 = vector.broadcast %20 : vector<1x128xf32> to vector<8x128xf32>
    %22 = arith.addf %19, %21 : vector<8x128xf32>
    %c0_17 = arith.constant 0 : index
    %c0_18 = arith.constant 0 : index
    %23 = vector.load %arg8[%c0_17, %c0_18] : memref<8x128xf32, #tpu.memory_space<vmem>>, vector<8x128xf32>
    tpu.vector_store %arg8[%c0_17, %c0_18], %22 {strides = array<i32>} : memref<8x128xf32, #tpu.memory_space<vmem>>, vector<8x128xf32>,
    return
  }
  func.func @transform_0(%arg0: i32) -> (i32, i32) {
    %c0_i32 = arith.constant 0 : i32
    %c0_i32_0 = arith.constant 0 : i32
    return %arg0, %c0_i32 : i32, i32
  }
  func.func @transform_1(%arg0: i32) -> (i32, i32) {
    %c0_i32 = arith.constant 0 : i32
    %c0_i32_0 = arith.constant 0 : i32
    %c0_i32_1 = arith.constant 0 : i32
    return %c0_i32, %c0_i32_0 : i32, i32
  }
  func.func @transform_2(%arg0: i32) -> (i32, i32) {
    %c0_i32 = arith.constant 0 : i32
    %c0_i32_0 = arith.constant 0 : i32
    %c0_i32_1 = arith.constant 0 : i32
    return %c0_i32, %c0_i32_0 : i32, i32
  }
  func.func @transform_3(%arg0: i32) -> (i32, i32) {
    %c0_i32 = arith.constant 0 : i32
    %c0_i32_0 = arith.constant 0 : i32
    %c0_i32_1 = arith.constant 0 : i32
    return %c0_i32, %c0_i32_0 : i32, i32
  }
  func.func @transform_4(%arg0: i32) -> (i32, i32) {
    %c0_i32 = arith.constant 0 : i32
    %c0_i32_0 = arith.constant 0 : i32
    %c0_i32_1 = arith.constant 0 : i32
    return %c0_i32, %c0_i32_0 : i32, i32
  }
  func.func @transform_5(%arg0: i32) -> (i32, i32) {
    %c0_i32 = arith.constant 0 : i32
    %c0_i32_0 = arith.constant 0 : i32
    %c0_i32_1 = arith.constant 0 : i32
    return %c0_i32, %c0_i32_0 : i32, i32
  }
  func.func @transform_6(%arg0: i32) -> (i32, i32) {
    %c0_i32 = arith.constant 0 : i32
    %c0_i32_0 = arith.constant 0 : i32
    %c0_i32_1 = arith.constant 0 : i32
    return %c0_i32, %c0_i32_0 : i32, i32
  }
  func.func @transform_7(%arg0: i32) -> (i32, i32) {
    %c0_i32 = arith.constant 0 : i32
    %c0_i32_0 = arith.constant 0 : i32
    return %arg0, %c0_i32 : i32, i32
  }
}

module attributes {stable_mosaic.version = 11 : i64} {
  func.func @decoder_kernel(%arg0: i32, %arg1: memref<8x32xf32, #tpu.memory_space<vmem>>, %arg2: memref<32x256xbf16, #tpu.memory_space<vmem>>, %arg3: memref<1x256xf32, #tpu.memory_space<vmem>>, %arg4: memref<256x512xbf16, #tpu.memory_space<vmem>>, %arg5: memref<1x512xf32, #tpu.memory_space<vmem>>, %arg6: memref<512x128xbf16, #tpu.memory_space<vmem>>, %arg7: memref<1x128xf32, #tpu.memory_space<vmem>>, %arg8: memref<8x128xf32, #tpu.memory_space<vmem>>) attributes {dimension_semantics = [#tpu.dimension_semantics<parallel>], iteration_bounds = array<i64: 2>, scalar_prefetch = 0 : i64, scratch_operands = 0 : i64, tpu.core_type = #tpu.core_type<tc>, window_params = [{transform_indices = @transform_0, window_bounds = array<i64: 8, 32>}, {pipeline_mode = #tpu.pipeline_mode<synchronous>, transform_indices = @transform_1, window_bounds = array<i64: 32, 256>}, {pipeline_mode = #tpu.pipeline_mode<synchronous>, transform_indices = @transform_2, window_bounds = array<i64: 1, 256>}, {pipeline_mode = #tpu.pipeline_mode<synchronous>, transform_indices = @transform_3, window_bounds = array<i64: 256, 512>}, {pipeline_mode = #tpu.pipeline_mode<synchronous>, transform_indices = @transform_4, window_bounds = array<i64: 1, 512>}, {pipeline_mode = #tpu.pipeline_mode<synchronous>, transform_indices = @transform_5, window_bounds = array<i64: 512, 128>}, {pipeline_mode = #tpu.pipeline_mode<synchronous>, transform_indices = @transform_6, window_bounds = array<i64: 1, 128>}, {transform_indices = @transform_7, window_bounds = array<i64: 8, 128>}]} {
    %c0 = arith.constant 0 : index
    %c0_0 = arith.constant 0 : index
    %0 = vector.load %arg1[%c0, %c0_0] : memref<8x32xf32, #tpu.memory_space<vmem>>, vector<8x32xf32>
    %1 = arith.truncf %0 : vector<8x32xf32> to vector<8x32xbf16>
    %c0_1 = arith.constant 0 : index
    %c0_2 = arith.constant 0 : index
    %2 = vector.load %arg2[%c0_1, %c0_2] : memref<32x256xbf16, #tpu.memory_space<vmem>>, vector<32x256xbf16>
    %cst = arith.constant dense<0.000000e+00> : vector<8x256xf32>
    %3 = tpu.matmul %1, %2, %cst {dimension_numbers = #tpu.dot_dimension_numbers<[1], [0], [0], [1], [0, 0, 1, 1], [], []>} : vector<8x32xbf16>, vector<32x256xbf16>, vector<8x256xf32> -> vector<8x256xf32>
    %c0_3 = arith.constant 0 : index
    %c0_4 = arith.constant 0 : index
    %4 = vector.load %arg3[%c0_3, %c0_4] : memref<1x256xf32, #tpu.memory_space<vmem>>, vector<1x256xf32>
    %5 = vector.broadcast %4 : vector<1x256xf32> to vector<8x256xf32>
    %6 = arith.addf %3, %5 : vector<8x256xf32>
    %cst_5 = arith.constant 0.000000e+00 : f32
    %7 = vector.broadcast %cst_5 : f32 to vector<8x256xf32>
    %8 = arith.maximumf %6, %7 : vector<8x256xf32>
    %9 = arith.truncf %8 : vector<8x256xf32> to vector<8x256xbf16>
    %c0_6 = arith.constant 0 : index
    %c0_7 = arith.constant 0 : index
    %10 = vector.load %arg4[%c0_6, %c0_7] : memref<256x512xbf16, #tpu.memory_space<vmem>>, vector<256x512xbf16>
    %cst_8 = arith.constant dense<0.000000e+00> : vector<8x512xf32>
    %11 = tpu.matmul %9, %10, %cst_8 {dimension_numbers = #tpu.dot_dimension_numbers<[1], [0], [0], [1], [0, 0, 1, 1], [], []>} : vector<8x256xbf16>, vector<256x512xbf16>, vector<8x512xf32> -> vector<8x512xf32>
    %c0_9 = arith.constant 0 : index
    %c0_10 = arith.constant 0 : index
    %12 = vector.load %arg5[%c0_9, %c0_10] : memref<1x512xf32, #tpu.memory_space<vmem>>, vector<1x512xf32>
    %13 = vector.broadcast %12 : vector<1x512xf32> to vector<8x512xf32>
    %14 = arith.addf %11, %13 : vector<8x512xf32>
    %cst_11 = arith.constant 0.000000e+00 : f32
    %15 = vector.broadcast %cst_11 : f32 to vector<8x512xf32>
    %16 = arith.maximumf %14, %15 : vector<8x512xf32>
    %17 = arith.truncf %16 : vector<8x512xf32> to vector<8x512xbf16>
    %c0_12 = arith.constant 0 : index
    %c0_13 = arith.constant 0 : index
    %18 = vector.load %arg6[%c0_12, %c0_13] : memref<512x128xbf16, #tpu.memory_space<vmem>>, vector<512x128xbf16>
    %cst_14 = arith.constant dense<0.000000e+00> : vector<8x128xf32>
    %19 = tpu.matmul %17, %18, %cst_14 {dimension_numbers = #tpu.dot_dimension_numbers<[1], [0], [0], [1], [0, 0, 1, 1], [], []>} : vector<8x512xbf16>, vector<512x128xbf16>, vector<8x128xf32> -> vector<8x128xf32>
    %c0_15 = arith.constant 0 : index
    %c0_16 = arith.constant 0 : index
    %20 = vector.load %arg7[%c0_15, %c0_16] : memref<1x128xf32, #tpu.memory_space<vmem>>, vector<1x128xf32>
    %21 = vector.broadcast %20 : vector<1x128xf32> to vector<8x128xf32>
    %22 = arith.addf %19, %21 : vector<8x128xf32>
    %c0_17 = arith.constant 0 : index
    %c0_18 = arith.constant 0 : index
    %23 = vector.load %arg8[%c0_17, %c0_18] : memref<8x128xf32, #tpu.memory_space<vmem>>, vector<8x128xf32>
    tpu.vector_store %arg8[%c0_17, %c0_18], %22 {strides = array<i32>} : memref<8x128xf32, #tpu.memory_space<vmem>>, vector<8x128xf32>,
    return
  }
  func.func @transform_0(%arg0: i32) -> (i32, i32) {
    %c0_i32 = arith.constant 0 : i32
    %c0_i32_0 = arith.constant 0 : i32
    return %arg0, %c0_i32 : i32, i32
  }
  func.func @transform_1(%arg0: i32) -> (i32, i32) {
    %c0_i32 = arith.constant 0 : i32
    %c0_i32_0 = arith.constant 0 : i32
    %c0_i32_1 = arith.constant 0 : i32
    return %c0_i32, %c0_i32_0 : i32, i32
  }
  func.func @transform_2(%arg0: i32) -> (i32, i32) {
    %c0_i32 = arith.constant 0 : i32
    %c0_i32_0 = arith.constant 0 : i32
    %c0_i32_1 = arith.constant 0 : i32
    return %c0_i32, %c0_i32_0 : i32, i32
  }
  func.func @transform_3(%arg0: i32) -> (i32, i32) {
    %c0_i32 = arith.constant 0 : i32
    %c0_i32_0 = arith.constant 0 : i32
    %c0_i32_1 = arith.constant 0 : i32
    return %c0_i32, %c0_i32_0 : i32, i32
  }
  func.func @transform_4(%arg0: i32) -> (i32, i32) {
    %c0_i32 = arith.constant 0 : i32
    %c0_i32_0 = arith.constant 0 : i32
    %c0_i32_1 = arith.constant 0 : i32
    return %c0_i32, %c0_i32_0 : i32, i32
  }
  func.func @transform_5(%arg0: i32) -> (i32, i32) {
    %c0_i32 = arith.constant 0 : i32
    %c0_i32_0 = arith.constant 0 : i32
    %c0_i32_1 = arith.constant 0 : i32
    return %c0_i32, %c0_i32_0 : i32, i32
  }
  func.func @transform_6(%arg0: i32) -> (i32, i32) {
    %c0_i32 = arith.constant 0 : i32
    %c0_i32_0 = arith.constant 0 : i32
    %c0_i32_1 = arith.constant 0 : i32
    return %c0_i32, %c0_i32_0 : i32, i32
  }
  func.func @transform_7(%arg0: i32) -> (i32, i32) {
    %c0_i32 = arith.constant 0 : i32
    %c0_i32_0 = arith.constant 0 : i32
    return %arg0, %c0_i32 : i32, i32
  }
}

</mosaic_0001>

<llo_original>
// kernel: tpu_custom_call.1
$region0: #{tpu_custom_call.1}
  #allocation0 [shape = 'u32[]', space=smem, size = 0x4, offset = 0x4, fixed_abs, tag = 'smem constant byte address 0x4 - core index']
  #allocation1 [shape = 'u32[144,128]{1,0:T(1,128)}', space=vmem, size = 0x12000, scoped, tag = 'internal scratch']
  %s0 = inlined_call_operand.hbm [shape: f32[16,32], index: 0, kind: input, shape index: {}]
  %s1 = inlined_call_operand.hbm [shape: bf16[32,256], index: 1, kind: input, shape index: {}]
  %s2 = inlined_call_operand.vmem [shape: f32[1,256], index: 2, kind: input, shape index: {}]
  %s3 = inlined_call_operand.hbm [shape: bf16[256,512], index: 3, kind: input, shape index: {}]
  %s4 = inlined_call_operand.vmem [shape: f32[1,512], index: 4, kind: input, shape index: {}]
  %s5 = inlined_call_operand.hbm [shape: bf16[512,128], index: 5, kind: input, shape index: {}]
  %s6 = inlined_call_operand.vmem [shape: f32[1,128], index: 6, kind: input, shape index: {}]
  %s7 = inlined_call_operand.hbm [shape: f32[16,128], index: 7, kind: output, shape index: {}]
  %s8 = sld [smem:[#allocation0]]
  $region77: #{tpu_custom_call.1} parent=0
    _
  %s10 = ssub.s32 1, %s8
  %s11 = scalar_select 0, %s10, %s8
  $region1: #{tpu_custom_call.1} parent=0
    #allocation2 [shape = 'u8[8192]{0}', space=vmem, size = 0x2000, scoped, tag = 'input window, operand 0']
    #allocation3 [shape = 's32[2]{0}', space=sflag, size = 0x8, scoped, tag = 'scoped memory for tpu_custom_call.1']
    #allocation4 [shape = 's32[2]{0}', space=sflag, size = 0x8, scoped, tag = 'scoped memory for tpu_custom_call.1']
    #allocation5 [shape = 'u8[16384]{0}', space=vmem, size = 0x4000, scoped, tag = 'input window, operand 1, single buffered']
    #allocation6 [shape = 's32[1]{0}', space=sflag, size = 0x4, scoped, tag = 'scoped memory for tpu_custom_call.1']
    #allocation7 [shape = 'u8[262144]{0}', space=vmem, size = 0x40000, scoped, tag = 'input window, operand 3, single buffered']
    #allocation8 [shape = 'u8[131072]{0}', space=vmem, size = 0x20000, scoped, tag = 'input window, operand 5, single buffered']
    #allocation9 [shape = 's32[1]{0}', space=sflag, size = 0x4, scoped, tag = 'scoped memory for tpu_custom_call.1']
    #allocation10 [shape = 'u8[8192]{0}', space=vmem, size = 0x2000, scoped, tag = 'output window, operand 0']
    %12 = vsyncpa [#allocation3], 0
    %s13 = scalar_lea.sflag [#allocation3], 1
    %14 = vsyncpa %s13, 0
    %15 = vsyncpa [#allocation6], 0
    %16 = vsyncpa [#allocation9], 0
    %17 = vsyncpa [#allocation4], 0
    %s18 = scalar_lea.sflag [#allocation4], 1
    %19 = vsyncpa %s18, 0
    loop: start=0, step=1, limit=4
    $region2: #{tpu_custom_call.1} parent=1 // loop_pre_header
      _
    $region3: #{tpu_custom_call.1} parent=1 // loop_header
      %s21 = sphi 0, %s25
      %p22 = scmp.ge.s32.totalorder %s21, 4
      %s31 = sphi 0, %s33
      %s34 = sphi 0, %s31
      %s35 = sphi 0, %s34
      %s51 = sphi 0, %s35
      %s55 = sphi 0, %s55
      %s57 = sphi 0, %s55
      %s58 = sphi 0, %s57
      %s72 = sphi 0, %s58
      %s76 = sphi 0, %s76
      %s78 = sphi 0, %s76
      %s79 = sphi 0, %s78
      %s93 = sphi 0, %s79
      %s97 = sphi 0, %s97
      %s99 = sphi 0, %s97
      %s100 = sphi 0, %s99
      %s114 = sphi 0, %s100
      %s118 = sphi 0, %s118
      %s120 = sphi 0, %s118
      %s121 = sphi 0, %s120
      %s135 = sphi 0, %s121
      %s139 = sphi 0, %s139
      %s141 = sphi 0, %s139
      %s142 = sphi 0, %s141
      %s156 = sphi 0, %s142
      %s160 = sphi 0, %s160
      %s162 = sphi 0, %s160
      %s163 = sphi 0, %s162
      %s177 = sphi 0, %s163
      %s183 = sphi 0, %s185
      %s186 = sphi 0, %s183
      %s187 = sphi 0, %s186
      %s203 = sphi 0, %s187
    $region4: #{tpu_custom_call.1} parent=1 // loop_header_branch
      %24 = sbr.rel (%p22) target = $region8
    $region5: #{tpu_custom_call.1} parent=1 // loop_body
      %s26 = ssub.s32 %s21, 1
      %s27 = ssub.s32 %s21, 2
      %s28 = sadd.s32 %s21, 1
      %s29 = ssub.s32 %s21, %s28
      %p30 = scmp.eq.s32.totalorder %s29, 0
      %s32 = sadd.s32 %s31, 1
      %s33 = scalar_select %p30, %s31, %s32
      %p36 = pneg %p30
      %p37 = scmp.eq.s32.totalorder %s21, 1
      %p38 = por %p36, %p37
      %p39 = scmp.ne.s32.totalorder %s31, %s34
      %p40 = scmp.eq.s32.totalorder %s21, 0
      %p41 = por %p39, %p40
      %p42 = scmp.ne.s32.totalorder %s31, %s34
      %p43 = scmp.eq.s32.totalorder %s26, 1
      %p44 = por %p42, %p43
      %p45 = scmp.ne.s32.totalorder %s34, %s35
      %p46 = scmp.eq.s32.totalorder %s26, 0
      %p47 = por %p45, %p46
      %p48 = scmp.ne.s32.totalorder %s34, %s35
      %p49 = scmp.eq.s32.totalorder %s27, 1
      %p50 = por %p48, %p49
      %p52 = scmp.ne.s32.totalorder %s35, %s51
      %p53 = scmp.eq.s32.totalorder %s27, 0
      %p54 = por %p52, %p53
      %s56 = sadd.s32 %s55, 1
      %p59 = scmp.eq.s32.totalorder %s21, 1
      %p60 = scmp.ne.s32.totalorder %s55, %s57
      %p61 = scmp.eq.s32.totalorder %s21, 0
      %p62 = por %p60, %p61
      %p63 = scmp.ne.s32.totalorder %s55, %s57
      %p64 = scmp.eq.s32.totalorder %s26, 1
      %p65 = por %p63, %p64
      %p66 = scmp.ne.s32.totalorder %s57, %s58
      %p67 = scmp.eq.s32.totalorder %s26, 0
      %p68 = por %p66, %p67
      %p69 = scmp.ne.s32.totalorder %s57, %s58
      %p70 = scmp.eq.s32.totalorder %s27, 1
      %p71 = por %p69, %p70
      %p73 = scmp.ne.s32.totalorder %s58, %s72
      %p74 = scmp.eq.s32.totalorder %s27, 0
      %p75 = por %p73, %p74
      %s77 = sadd.s32 %s76, 1
      %p80 = scmp.eq.s32.totalorder %s21, 1
      %p81 = scmp.ne.s32.totalorder %s76, %s78
      %p82 = scmp.eq.s32.totalorder %s21, 0
      %p83 = por %p81, %p82
      %p84 = scmp.ne.s32.totalorder %s76, %s78
      %p85 = scmp.eq.s32.totalorder %s26, 1
      %p86 = por %p84, %p85
      %p87 = scmp.ne.s32.totalorder %s78, %s79
      %p88 = scmp.eq.s32.totalorder %s26, 0
      %p89 = por %p87, %p88
      %p90 = scmp.ne.s32.totalorder %s78, %s79
      %p91 = scmp.eq.s32.totalorder %s27, 1
      %p92 = por %p90, %p91
      %p94 = scmp.ne.s32.totalorder %s79, %s93
      %p95 = scmp.eq.s32.totalorder %s27, 0
      %p96 = por %p94, %p95
      %s98 = sadd.s32 %s97, 1
      %p101 = scmp.eq.s32.totalorder %s21, 1
      %p102 = scmp.ne.s32.totalorder %s97, %s99
      %p103 = scmp.eq.s32.totalorder %s21, 0
      %p104 = por %p102, %p103
      %p105 = scmp.ne.s32.totalorder %s97, %s99
      %p106 = scmp.eq.s32.totalorder %s26, 1
      %p107 = por %p105, %p106
      %p108 = scmp.ne.s32.totalorder %s99, %s100
      %p109 = scmp.eq.s32.totalorder %s26, 0
      %p110 = por %p108, %p109
      %p111 = scmp.ne.s32.totalorder %s99, %s100
      %p112 = scmp.eq.s32.totalorder %s27, 1
      %p113 = por %p111, %p112
      %p115 = scmp.ne.s32.totalorder %s100, %s114
      %p116 = scmp.eq.s32.totalorder %s27, 0
      %p117 = por %p115, %p116
      %s119 = sadd.s32 %s118, 1
      %p122 = scmp.eq.s32.totalorder %s21, 1
      %p123 = scmp.ne.s32.totalorder %s118, %s120
      %p124 = scmp.eq.s32.totalorder %s21, 0
      %p125 = por %p123, %p124
      %p126 = scmp.ne.s32.totalorder %s118, %s120
      %p127 = scmp.eq.s32.totalorder %s26, 1
      %p128 = por %p126, %p127
      %p129 = scmp.ne.s32.totalorder %s120, %s121
      %p130 = scmp.eq.s32.totalorder %s26, 0
      %p131 = por %p129, %p130
      %p132 = scmp.ne.s32.totalorder %s120, %s121
      %p133 = scmp.eq.s32.totalorder %s27, 1
      %p134 = por %p132, %p133
      %p136 = scmp.ne.s32.totalorder %s121, %s135
      %p137 = scmp.eq.s32.totalorder %s27, 0
      %p138 = por %p136, %p137
      %s140 = sadd.s32 %s139, 1
      %p143 = scmp.eq.s32.totalorder %s21, 1
      %p144 = scmp.ne.s32.totalorder %s139, %s141
      %p145 = scmp.eq.s32.totalorder %s21, 0
      %p146 = por %p144, %p145
      %p147 = scmp.ne.s32.totalorder %s139, %s141
      %p148 = scmp.eq.s32.totalorder %s26, 1
      %p149 = por %p147, %p148
      %p150 = scmp.ne.s32.totalorder %s141, %s142
      %p151 = scmp.eq.s32.totalorder %s26, 0
      %p152 = por %p150, %p151
      %p153 = scmp.ne.s32.totalorder %s141, %s142
      %p154 = scmp.eq.s32.totalorder %s27, 1
      %p155 = por %p153, %p154
      %p157 = scmp.ne.s32.totalorder %s142, %s156
      %p158 = scmp.eq.s32.totalorder %s27, 0
      %p159 = por %p157, %p158
      %s161 = sadd.s32 %s160, 1
      %p164 = scmp.eq.s32.totalorder %s21, 1
      %p165 = scmp.ne.s32.totalorder %s160, %s162
      %p166 = scmp.eq.s32.totalorder %s21, 0
      %p167 = por %p165, %p166
      %p168 = scmp.ne.s32.totalorder %s160, %s162
      %p169 = scmp.eq.s32.totalorder %s26, 1
      %p170 = por %p168, %p169
      %p171 = scmp.ne.s32.totalorder %s162, %s163
      %p172 = scmp.eq.s32.totalorder %s26, 0
      %p173 = por %p171, %p172
      %p174 = scmp.ne.s32.totalorder %s162, %s163
      %p175 = scmp.eq.s32.totalorder %s27, 1
      %p176 = por %p174, %p175
      %p178 = scmp.ne.s32.totalorder %s163, %s177
      %p179 = scmp.eq.s32.totalorder %s27, 0
      %p180 = por %p178, %p179
      %s181 = ssub.s32 %s21, %s28
      %p182 = scmp.eq.s32.totalorder %s181, 0
      %s184 = sadd.s32 %s183, 1
      %s185 = scalar_select %p182, %s183, %s184
      %p188 = pneg %p182
      %p189 = scmp.eq.s32.totalorder %s21, 1
      %p190 = por %p188, %p189
      %p191 = scmp.ne.s32.totalorder %s183, %s186
      %p192 = scmp.eq.s32.totalorder %s21, 0
      %p193 = por %p191, %p192
      %p194 = scmp.ne.s32.totalorder %s183, %s186
      %p195 = scmp.eq.s32.totalorder %s26, 1
      %p196 = por %p194, %p195
      %p197 = scmp.ne.s32.totalorder %s186, %s187
      %p198 = scmp.eq.s32.totalorder %s26, 0
      %p199 = por %p197, %p198
      %p200 = scmp.ne.s32.totalorder %s186, %s187
      %p201 = scmp.eq.s32.totalorder %s27, 1
      %p202 = por %p200, %p201
      %p204 = scmp.ne.s32.totalorder %s187, %s203
      %p205 = scmp.eq.s32.totalorder %s27, 0
      %p206 = por %p204, %p205
      %p207 = scmp.le.s32.totalorder 1, %s21
      %p208 = scmp.lt.s32.totalorder %s21, 3
      %p209 = pnand %p207, %p208
      %p210 = pneg %p209
      // Predicated region
      $region9: #{tpu_custom_call.1} parent=5 // pred_check
        _
      $region10: #{tpu_custom_call.1} parent=5 // pred_check_branch
        %212 = sbr.rel (%p209) target = $region12
      $region11: #{tpu_custom_call.1} parent=5 // pred_region
        %s213 = ssub.s32 %s21, 1
        // Predicated region
        $region13: #{tpu_custom_call.1} parent=11 // pred_check
          %p214 = pneg %p68
        $region14: #{tpu_custom_call.1} parent=11 // pred_check_branch
          %216 = sbr.rel (%p214) target = $region16
        $region15: #{tpu_custom_call.1} parent=11 // pred_region
          %s218 = ssub.s32 512, 512
          %219 = vsyncadd [#allocation6], %s218
          %s220 = sshll.u32 [#allocation5], 4
          %s221 = int_to_ptr.vmem [resolvable:$true] %s220
          %226 = dma.hbm_to_vmem [thread:$0]  %s1, 512, %s221, [#allocation6], 128, 128, 8
        $region16: #{tpu_custom_call.1} parent=11 // pred_fallthru
          _
        // Predicated region
        $region17: #{tpu_custom_call.1} parent=11 // pred_check
          %p227 = pneg %p89
        $region18: #{tpu_custom_call.1} parent=11 // pred_check_branch
          %229 = sbr.rel (%p227) target = $region20
        $region19: #{tpu_custom_call.1} parent=11 // pred_region
          _
        $region20: #{tpu_custom_call.1} parent=11 // pred_fallthru
          _
        // Predicated region
        $region21: #{tpu_custom_call.1} parent=11 // pred_check
          %p230 = pneg %p110
        $region22: #{tpu_custom_call.1} parent=11 // pred_check_branch
          %232 = sbr.rel (%p230) target = $region24
        $region23: #{tpu_custom_call.1} parent=11 // pred_region
          %s234 = ssub.s32 8192, 8192
          %235 = vsyncadd [#allocation6], %s234
          %s236 = sshll.u32 [#allocation7], 4
          %s237 = int_to_ptr.vmem [resolvable:$true] %s236
          %242 = dma.hbm_to_vmem [thread:$0]  %s3, 8192, %s237, [#allocation6], 256, 256, 16
        $region24: #{tpu_custom_call.1} parent=11 // pred_fallthru
          _
        // Predicated region
        $region25: #{tpu_custom_call.1} parent=11 // pred_check
          %p243 = pneg %p131
        $region26: #{tpu_custom_call.1} parent=11 // pred_check_branch
          %245 = sbr.rel (%p243) target = $region28
        $region27: #{tpu_custom_call.1} parent=11 // pred_region
          _
        $region28: #{tpu_custom_call.1} parent=11 // pred_fallthru
          _
        // Predicated region
        $region29: #{tpu_custom_call.1} parent=11 // pred_check
          %p246 = pneg %p152
        $region30: #{tpu_custom_call.1} parent=11 // pred_check_branch
          %248 = sbr.rel (%p246) target = $region32
        $region31: #{tpu_custom_call.1} parent=11 // pred_region
          %s250 = ssub.s32 4096, 4096
          %251 = vsyncadd [#allocation9], %s250
          %s252 = sshll.u32 [#allocation8], 4
          %s253 = int_to_ptr.vmem [resolvable:$true] %s252
          %258 = dma.hbm_to_vmem [thread:$0]  %s5, 4096, %s253, [#allocation9], 64, 64, 4
        $region32: #{tpu_custom_call.1} parent=11 // pred_fallthru
          _
        // Predicated region
        $region33: #{tpu_custom_call.1} parent=11 // pred_check
          %p259 = pneg %p173
        $region34: #{tpu_custom_call.1} parent=11 // pred_check_branch
          %261 = sbr.rel (%p259) target = $region36
        $region35: #{tpu_custom_call.1} parent=11 // pred_region
          _
        $region36: #{tpu_custom_call.1} parent=11 // pred_fallthru
          _
      $region12: #{tpu_custom_call.1} parent=5 // pred_fallthru
        _
      %p262 = scmp.lt.s32.totalorder %s21, 2
      // Predicated region
      $region37: #{tpu_custom_call.1} parent=5 // pred_check
        %p263 = pneg %p262
      $region38: #{tpu_custom_call.1} parent=5 // pred_check_branch
        %265 = sbr.rel (%p263) target = $region40
      $region39: #{tpu_custom_call.1} parent=5 // pred_region
        // Predicated region
        $region41: #{tpu_custom_call.1} parent=39 // pred_check
          %p266 = pneg %p41
        $region42: #{tpu_custom_call.1} parent=39 // pred_check_branch
          %268 = sbr.rel (%p266) target = $region44
        $region43: #{tpu_custom_call.1} parent=39 // pred_region
          %s269 = sand.u32 %s31, 1
          %s270 = scalar_lea.sflag [#allocation3], %s269
          %s271 = sand.u32 %s31, 1
          %s272 = smul.addr %s271, 8
          %s273 = scalar_lea.vmem [#allocation2], %s272
          %s275 = ssub.s32 128, 128
          %276 = vsyncadd %s270, %s275
          %s277 = smul.addr %s21, 128
          %s278 = scalar_lea.hbm %s0, %s277
          %s280 = sshll.u32 %s273, 4
          %s281 = int_to_ptr.vmem [resolvable:$true] %s280
          %283 = dma.hbm_to_vmem [thread:$0]  %s278, 128, %s281, %s270
        $region44: #{tpu_custom_call.1} parent=39 // pred_fallthru
          _
      $region40: #{tpu_custom_call.1} parent=5 // pred_fallthru
        _
      %p284 = scmp.le.s32.totalorder 1, %s21
      %p285 = scmp.lt.s32.totalorder %s21, 3
      %p286 = pnand %p284, %p285
      %p287 = pneg %p286
      // Predicated region
      $region45: #{tpu_custom_call.1} parent=5 // pred_check
        _
      $region46: #{tpu_custom_call.1} parent=5 // pred_check_branch
        %289 = sbr.rel (%p286) target = $region48
      $region47: #{tpu_custom_call.1} parent=5 // pred_region
        %s290 = ssub.s32 %s21, 1
        %s291 = sand.u32 %s34, 1
        %s292 = scalar_lea.sflag [#allocation3], %s291
        %s293 = sand.u32 %s34, 1
        %s294 = smul.addr %s293, 8
        %s295 = scalar_lea.vmem [#allocation2], %s294
        // Predicated region
        $region49: #{tpu_custom_call.1} parent=47 // pred_check
          %p296 = pneg %p47
        $region50: #{tpu_custom_call.1} parent=47 // pred_check_branch
          %298 = sbr.rel (%p296) target = $region52
        $region51: #{tpu_custom_call.1} parent=47 // pred_region
          %299 = dma.done %s292, 128
        $region52: #{tpu_custom_call.1} parent=47 // pred_fallthru
          _
        // Predicated region
        $region53: #{tpu_custom_call.1} parent=47 // pred_check
          %p300 = pneg %p68
        $region54: #{tpu_custom_call.1} parent=47 // pred_check_branch
          %302 = sbr.rel (%p300) target = $region56
        $region55: #{tpu_custom_call.1} parent=47 // pred_region
          %303 = dma.done [#allocation6], 512
        $region56: #{tpu_custom_call.1} parent=47 // pred_fallthru
          _
        // Predicated region
        $region57: #{tpu_custom_call.1} parent=47 // pred_check
          %p304 = pneg %p110
        $region58: #{tpu_custom_call.1} parent=47 // pred_check_branch
          %306 = sbr.rel (%p304) target = $region60
        $region59: #{tpu_custom_call.1} parent=47 // pred_region
          %307 = dma.done [#allocation6], 8192
        $region60: #{tpu_custom_call.1} parent=47 // pred_fallthru
          _
        // Predicated region
        $region61: #{tpu_custom_call.1} parent=47 // pred_check
          %p308 = pneg %p152
        $region62: #{tpu_custom_call.1} parent=47 // pred_check_branch
          %310 = sbr.rel (%p308) target = $region64
        $region63: #{tpu_custom_call.1} parent=47 // pred_region
          %311 = dma.done [#allocation9], 4096
        $region64: #{tpu_custom_call.1} parent=47 // pred_fallthru
          _
        %s312 = sand.u32 %s34, 1
        %s313 = scalar_lea.sflag [#allocation3], %s312
        %s314 = sand.u32 %s34, 1
        %s315 = smul.addr %s314, 8
        %s316 = scalar_lea.vmem [#allocation2], %s315
        %p317 = pneg %p47
        %p318 = pneg %p44
        %p319 = pneg %p68
        %p320 = pneg %p65
        %p321 = pneg %p89
        %p322 = pneg %p86
        %p323 = pneg %p110
        %p324 = pneg %p107
        %p325 = pneg %p131
        %p326 = pneg %p128
        %p327 = pneg %p152
        %p328 = pneg %p149
        %p329 = pneg %p173
        %p330 = pneg %p170
        %p331 = pneg %p199
        %p332 = pneg %p196
        %s333 = sand.u32 %s186, 1
        %s334 = scalar_lea.sflag [#allocation4], %s333
        %s335 = sand.u32 %s186, 1
        %s336 = smul.addr %s335, 8
        %s337 = scalar_lea.vmem [#allocation10], %s336
        %v339 = vld [vmem:[%s295] sm:$0xff]
        %v340 = vpack.c.bf16 %v339, %v339
        %v341 = vld [vmem:[#allocation5] sm:$0xff]
        %v342 = vld [vmem:[#allocation5 + $0x8] sm:$0xff]
        %v343 = vld [vmem:[#allocation5 + $0x10] sm:$0xff]
        %v344 = vld [vmem:[#allocation5 + $0x18] sm:$0xff]
        %v345 = vld [vmem:[%s2] sm:$0x3]
        %v347 = vlaneseq
        %v348 = vshrl.u32 %v347, 7
        %v349 = vsub.s32 0, %v348
        %v350 = vrot.slane %v345, %v349
        %v351 = vlaneseq
        %v352 = vshrl.u32 %v351, 7
        %v353 = vsub.s32 1, %v352
        %v354 = vrot.slane %v345, %v353
        %v361 = vunpack.c.l.b16 %v341
        %v362 = vunpack.c.h.b16 %v341
        %v363 = vunpack.c.l.b16 %v342
        %v364 = vunpack.c.h.b16 %v342
        %v365 = vunpack.c.l.b16 %v343
        %v366 = vunpack.c.h.b16 %v343
        %v367 = vunpack.c.l.b16 %v344
        %v368 = vunpack.c.h.b16 %v344
        %v369 = vpack.c.b16 %v363, %v361
        %v370 = vpack.c.b16 %v364, %v362
        %v371 = vpack.c.b16 %v367, %v365
        %v372 = vpack.c.b16 %v368, %v366
        %vm377 = vcmask 261120
        %v379 = vsel %vm377, %v340, 0
        %381 = vmatprep.subr.bf16.mxu0 %v370
        %382 = vmatpush1.bf16.msra.mxu0 %v369
        %383 = vmatprep.subr.bf16.mxu0 %v372
        %384 = vmatpush1.bf16.msra.mxu0 %v371
        %385 = vmatprep.subr.bf16.mxu0 0
        %386 = vmatpush1.bf16.msra.mxu0 0
        %387 = vmatprep.subr.bf16.mxu0 0
        %388 = vmatpush1.bf16.msra.mxu0 0
        %389 = vmatprep.subr.bf16.mxu0 0
        %390 = vmatpush1.bf16.msra.mxu0 0
        %391 = vmatprep.subr.bf16.mxu0 0
        %392 = vmatpush1.bf16.msra.mxu0 0
        %393 = vmatprep.subr.bf16.mxu0 0
        %394 = vmatpush1.bf16.msra.mxu0 0
        %395 = vmatprep.subr.bf16.mxu0 0
        %396 = vmatpush1.bf16.msra.mxu0 0
        %397 = vmatprep.subr.bf16.mxu0 0
        %398 = vmatpush1.bf16.msra.mxu0 0
        %399 = vmatprep.subr.bf16.mxu0 0
        %400 = vmatpush1.bf16.msra.mxu0 0
        %401 = vmatprep.subr.bf16.mxu0 0
        %402 = vmatpush1.bf16.msra.mxu0 0
        %403 = vmatprep.subr.bf16.mxu0 0
        %404 = vmatpush1.bf16.msra.mxu0 0
        %405 = vmatprep.subr.bf16.mxu0 0
        %406 = vmatpush1.bf16.msra.mxu0 0
        %407 = vmatprep.subr.bf16.mxu0 0
        %408 = vmatpush1.bf16.msra.mxu0 0
        %409 = vmatprep.subr.bf16.mxu0 0
        %410 = vmatpush1.bf16.msra.mxu0 0
        %411 = vmatprep.subr.bf16.mxu0 0
        %412 = vmatpush1.bf16.msra.mxu0 0
        %413 = vmatprep.mubr.bf16.mxu0 0
        %414 = vmatmul.mubr.bf16.gmra.mrb[0].mxu0 %v379
        %v415 = vpop.f32.mrb[0].mxu0
        %v416 = vadd.f32 %v350, %v415
        %v417 = vpop.f32.mrb[0].mxu0
        %v418 = vadd.f32 %v354, %v417
        %v419 = vpop.f32.mrb[0].mxu0
        %v420 = vpop.f32.mrb[0].mxu0
        %421 = vdwg.mxu0
        %v422 = vmax.f32 %v416, 0.0
        %v423 = vmax.f32 %v418, 0.0
        %v424 = vpack.c.bf16 %v422, %v422
        %v425 = vpack.c.bf16 %v423, %v423
        %v426 = vld [vmem:[#allocation7] sm:$0xff]
        %v427 = vld [vmem:[#allocation7 + $0x8] sm:$0xff]
        %v428 = vld [vmem:[#allocation7 + $0x10] sm:$0xff]
        %v429 = vld [vmem:[#allocation7 + $0x18] sm:$0xff]
        %v430 = vld [vmem:[#allocation7 + $0x20] sm:$0xff]
        %v431 = vld [vmem:[#allocation7 + $0x28] sm:$0xff]
        %v432 = vld [vmem:[#allocation7 + $0x30] sm:$0xff]
        %v433 = vld [vmem:[#allocation7 + $0x38] sm:$0xff]
        %v434 = vld [vmem:[#allocation7 + $0x40] sm:$0xff]
        %v435 = vld [vmem:[#allocation7 + $0x48] sm:$0xff]
        %v436 = vld [vmem:[#allocation7 + $0x50] sm:$0xff]
        %v437 = vld [vmem:[#allocation7 + $0x58] sm:$0xff]
        %v438 = vld [vmem:[#allocation7 + $0x60] sm:$0xff]
        %v439 = vld [vmem:[#allocation7 + $0x68] sm:$0xff]
        %v440 = vld [vmem:[#allocation7 + $0x70] sm:$0xff]
        %v441 = vld [vmem:[#allocation7 + $0x78] sm:$0xff]
        %v442 = vld [vmem:[#allocation7 + $0x80] sm:$0xff]
        %v443 = vld [vmem:[#allocation7 + $0x88] sm:$0xff]
        %v444 = vld [vmem:[#allocation7 + $0x90] sm:$0xff]
        %v445 = vld [vmem:[#allocation7 + $0x98] sm:$0xff]
        %v446 = vld [vmem:[#allocation7 + $0xa0] sm:$0xff]
        %v447 = vld [vmem:[#allocation7 + $0xa8] sm:$0xff]
        %v448 = vld [vmem:[#allocation7 + $0xb0] sm:$0xff]
        %v449 = vld [vmem:[#allocation7 + $0xb8] sm:$0xff]
        %v450 = vld [vmem:[#allocation7 + $0xc0] sm:$0xff]
        %v451 = vld [vmem:[#allocation7 + $0xc8] sm:$0xff]
        %v452 = vld [vmem:[#allocation7 + $0xd0] sm:$0xff]
        %v453 = vld [vmem:[#allocation7 + $0xd8] sm:$0xff]
        %v454 = vld [vmem:[#allocation7 + $0xe0] sm:$0xff]
        %v455 = vld [vmem:[#allocation7 + $0xe8] sm:$0xff]
        %v456 = vld [vmem:[#allocation7 + $0xf0] sm:$0xff]
        %v457 = vld [vmem:[#allocation7 + $0xf8] sm:$0xff]
        %v458 = vld [vmem:[#allocation7 + $0x100] sm:$0xff]
        %v459 = vld [vmem:[#allocation7 + $0x108] sm:$0xff]
        %v460 = vld [vmem:[#allocation7 + $0x110] sm:$0xff]
        %v461 = vld [vmem:[#allocation7 + $0x118] sm:$0xff]
        %v462 = vld [vmem:[#allocation7 + $0x120] sm:$0xff]
        %v463 = vld [vmem:[#allocation7 + $0x128] sm:$0xff]
        %v464 = vld [vmem:[#allocation7 + $0x130] sm:$0xff]
        %v465 = vld [vmem:[#allocation7 + $0x138] sm:$0xff]
        %v466 = vld [vmem:[#allocation7 + $0x140] sm:$0xff]
        %v467 = vld [vmem:[#allocation7 + $0x148] sm:$0xff]
        %v468 = vld [vmem:[#allocation7 + $0x150] sm:$0xff]
        %v469 = vld [vmem:[#allocation7 + $0x158] sm:$0xff]
        %v470 = vld [vmem:[#allocation7 + $0x160] sm:$0xff]
        %v471 = vld [vmem:[#allocation7 + $0x168] sm:$0xff]
        %v472 = vld [vmem:[#allocation7 + $0x170] sm:$0xff]
        %v473 = vld [vmem:[#allocation7 + $0x178] sm:$0xff]
        %v474 = vld [vmem:[#allocation7 + $0x180] sm:$0xff]
        %v475 = vld [vmem:[#allocation7 + $0x188] sm:$0xff]
        %v476 = vld [vmem:[#allocation7 + $0x190] sm:$0xff]
        %v477 = vld [vmem:[#allocation7 + $0x198] sm:$0xff]
        %v478 = vld [vmem:[#allocation7 + $0x1a0] sm:$0xff]
        %v479 = vld [vmem:[#allocation7 + $0x1a8] sm:$0xff]
        %v480 = vld [vmem:[#allocation7 + $0x1b0] sm:$0xff]
        %v481 = vld [vmem:[#allocation7 + $0x1b8] sm:$0xff]
        %v482 = vld [vmem:[#allocation7 + $0x1c0] sm:$0xff]
        %v483 = vld [vmem:[#allocation7 + $0x1c8] sm:$0xff]
        %v484 = vld [vmem:[#allocation7 + $0x1d0] sm:$0xff]
        %v485 = vld [vmem:[#allocation7 + $0x1d8] sm:$0xff]
        %v486 = vld [vmem:[#allocation7 + $0x1e0] sm:$0xff]
        %v487 = vld [vmem:[#allocation7 + $0x1e8] sm:$0xff]
        %v488 = vld [vmem:[#allocation7 + $0x1f0] sm:$0xff]
        %v489 = vld [vmem:[#allocation7 + $0x1f8] sm:$0xff]
        %v490 = vld [vmem:[%s4] sm:$0xf]
        %v492 = vlaneseq
        %v493 = vshrl.u32 %v492, 7
        %v494 = vsub.s32 0, %v493
        %v495 = vrot.slane %v490, %v494
        %v496 = vlaneseq
        %v497 = vshrl.u32 %v496, 7
        %v498 = vsub.s32 1, %v497
        %v499 = vrot.slane %v490, %v498
        %v500 = vlaneseq
        %v501 = vshrl.u32 %v500, 7
        %v502 = vsub.s32 2, %v501
        %v503 = vrot.slane %v490, %v502
        %v504 = vlaneseq
        %v505 = vshrl.u32 %v504, 7
        %v506 = vsub.s32 3, %v505
        %v507 = vrot.slane %v490, %v506
        %v576 = vunpack.c.l.b16 %v426
        %v577 = vunpack.c.h.b16 %v426
        %v578 = vunpack.c.l.b16 %v427
        %v579 = vunpack.c.h.b16 %v427
        %v580 = vunpack.c.l.b16 %v428
        %v581 = vunpack.c.h.b16 %v428
        %v582 = vunpack.c.l.b16 %v429
        %v583 = vunpack.c.h.b16 %v429
        %v584 = vunpack.c.l.b16 %v430
        %v585 = vunpack.c.h.b16 %v430
        %v586 = vunpack.c.l.b16 %v431
        %v587 = vunpack.c.h.b16 %v431
        %v588 = vunpack.c.l.b16 %v432
        %v589 = vunpack.c.h.b16 %v432
        %v590 = vunpack.c.l.b16 %v433
        %v591 = vunpack.c.h.b16 %v433
        %v592 = vunpack.c.l.b16 %v434
        %v593 = vunpack.c.h.b16 %v434
        %v594 = vunpack.c.l.b16 %v435
        %v595 = vunpack.c.h.b16 %v435
        %v596 = vunpack.c.l.b16 %v436
        %v597 = vunpack.c.h.b16 %v436
        %v598 = vunpack.c.l.b16 %v437
        %v599 = vunpack.c.h.b16 %v437
        %v600 = vunpack.c.l.b16 %v438
        %v601 = vunpack.c.h.b16 %v438
        %v602 = vunpack.c.l.b16 %v439
        %v603 = vunpack.c.h.b16 %v439
        %v604 = vunpack.c.l.b16 %v440
        %v605 = vunpack.c.h.b16 %v440
        %v606 = vunpack.c.l.b16 %v441
        %v607 = vunpack.c.h.b16 %v441
        %v608 = vunpack.c.l.b16 %v442
        %v609 = vunpack.c.h.b16 %v442
        %v610 = vunpack.c.l.b16 %v443
        %v611 = vunpack.c.h.b16 %v443
        %v612 = vunpack.c.l.b16 %v444
        %v613 = vunpack.c.h.b16 %v444
        %v614 = vunpack.c.l.b16 %v445
        %v615 = vunpack.c.h.b16 %v445
        %v616 = vunpack.c.l.b16 %v446
        %v617 = vunpack.c.h.b16 %v446
        %v618 = vunpack.c.l.b16 %v447
        %v619 = vunpack.c.h.b16 %v447
        %v620 = vunpack.c.l.b16 %v448
        %v621 = vunpack.c.h.b16 %v448
        %v622 = vunpack.c.l.b16 %v449
        %v623 = vunpack.c.h.b16 %v449
        %v624 = vunpack.c.l.b16 %v450
        %v625 = vunpack.c.h.b16 %v450
        %v626 = vunpack.c.l.b16 %v451
        %v627 = vunpack.c.h.b16 %v451
        %v628 = vunpack.c.l.b16 %v452
        %v629 = vunpack.c.h.b16 %v452
        %v630 = vunpack.c.l.b16 %v453
        %v631 = vunpack.c.h.b16 %v453
        %v632 = vunpack.c.l.b16 %v454
        %v633 = vunpack.c.h.b16 %v454
        %v634 = vunpack.c.l.b16 %v455
        %v635 = vunpack.c.h.b16 %v455
        %v636 = vunpack.c.l.b16 %v456
        %v637 = vunpack.c.h.b16 %v456
        %v638 = vunpack.c.l.b16 %v457
        %v639 = vunpack.c.h.b16 %v457
        %v640 = vunpack.c.l.b16 %v458
        %v641 = vunpack.c.h.b16 %v458
        %v642 = vunpack.c.l.b16 %v459
        %v643 = vunpack.c.h.b16 %v459
        %v644 = vunpack.c.l.b16 %v460
        %v645 = vunpack.c.h.b16 %v460
        %v646 = vunpack.c.l.b16 %v461
        %v647 = vunpack.c.h.b16 %v461
        %v648 = vunpack.c.l.b16 %v462
        %v649 = vunpack.c.h.b16 %v462
        %v650 = vunpack.c.l.b16 %v463
        %v651 = vunpack.c.h.b16 %v463
        %v652 = vunpack.c.l.b16 %v464
        %v653 = vunpack.c.h.b16 %v464
        %v654 = vunpack.c.l.b16 %v465
        %v655 = vunpack.c.h.b16 %v465
        %v656 = vunpack.c.l.b16 %v466
        %v657 = vunpack.c.h.b16 %v466
        %v658 = vunpack.c.l.b16 %v467
        %v659 = vunpack.c.h.b16 %v467
        %v660 = vunpack.c.l.b16 %v468
        %v661 = vunpack.c.h.b16 %v468
        %v662 = vunpack.c.l.b16 %v469
        %v663 = vunpack.c.h.b16 %v469
        %v664 = vunpack.c.l.b16 %v470
        %v665 = vunpack.c.h.b16 %v470
        %v666 = vunpack.c.l.b16 %v471
        %v667 = vunpack.c.h.b16 %v471
        %v668 = vunpack.c.l.b16 %v472
        %v669 = vunpack.c.h.b16 %v472
        %v670 = vunpack.c.l.b16 %v473
        %v671 = vunpack.c.h.b16 %v473
        %v672 = vunpack.c.l.b16 %v474
        %v673 = vunpack.c.h.b16 %v474
        %v674 = vunpack.c.l.b16 %v475
        %v675 = vunpack.c.h.b16 %v475
        %v676 = vunpack.c.l.b16 %v476
        %v677 = vunpack.c.h.b16 %v476
        %v678 = vunpack.c.l.b16 %v477
        %v679 = vunpack.c.h.b16 %v477
        %v680 = vunpack.c.l.b16 %v478
        %v681 = vunpack.c.h.b16 %v478
        %v682 = vunpack.c.l.b16 %v479
        %v683 = vunpack.c.h.b16 %v479
        %v684 = vunpack.c.l.b16 %v480
        %v685 = vunpack.c.h.b16 %v480
        %v686 = vunpack.c.l.b16 %v481
        %v687 = vunpack.c.h.b16 %v481
        %v688 = vunpack.c.l.b16 %v482
        %v689 = vunpack.c.h.b16 %v482
        %v690 = vunpack.c.l.b16 %v483
        %v691 = vunpack.c.h.b16 %v483
        %v692 = vunpack.c.l.b16 %v484
        %v693 = vunpack.c.h.b16 %v484
        %v694 = vunpack.c.l.b16 %v485
        %v695 = vunpack.c.h.b16 %v485
        %v696 = vunpack.c.l.b16 %v486
        %v697 = vunpack.c.h.b16 %v486
        %v698 = vunpack.c.l.b16 %v487
        %v699 = vunpack.c.h.b16 %v487
        %v700 = vunpack.c.l.b16 %v488
        %v701 = vunpack.c.h.b16 %v488
        %v702 = vunpack.c.l.b16 %v489
        %v703 = vunpack.c.h.b16 %v489
        %v704 = vpack.c.b16 %v580, %v576
        %v705 = vpack.c.b16 %v581, %v577
        %v706 = vpack.c.b16 %v582, %v578
        %v707 = vpack.c.b16 %v583, %v579
        %v708 = vpack.c.b16 %v588, %v584
        %v709 = vpack.c.b16 %v589, %v585
        %v710 = vpack.c.b16 %v590, %v586
        %v711 = vpack.c.b16 %v591, %v587
        %v712 = vpack.c.b16 %v596, %v592
        %v713 = vpack.c.b16 %v597, %v593
        %v714 = vpack.c.b16 %v598, %v594
        %v715 = vpack.c.b16 %v599, %v595
        %v716 = vpack.c.b16 %v604, %v600
        %v717 = vpack.c.b16 %v605, %v601
        %v718 = vpack.c.b16 %v606, %v602
        %v719 = vpack.c.b16 %v607, %v603
        %v720 = vpack.c.b16 %v612, %v608
        %v721 = vpack.c.b16 %v613, %v609
        %v722 = vpack.c.b16 %v614, %v610
        %v723 = vpack.c.b16 %v615, %v611
        %v724 = vpack.c.b16 %v620, %v616
        %v725 = vpack.c.b16 %v621, %v617
        %v726 = vpack.c.b16 %v622, %v618
        %v727 = vpack.c.b16 %v623, %v619
        %v728 = vpack.c.b16 %v628, %v624
        %v729 = vpack.c.b16 %v629, %v625
        %v730 = vpack.c.b16 %v630, %v626
        %v731 = vpack.c.b16 %v631, %v627
        %v732 = vpack.c.b16 %v636, %v632
        %v733 = vpack.c.b16 %v637, %v633
        %v734 = vpack.c.b16 %v638, %v634
        %v735 = vpack.c.b16 %v639, %v635
        %v736 = vpack.c.b16 %v644, %v640
        %v737 = vpack.c.b16 %v645, %v641
        %v738 = vpack.c.b16 %v646, %v642
        %v739 = vpack.c.b16 %v647, %v643
        %v740 = vpack.c.b16 %v652, %v648
        %v741 = vpack.c.b16 %v653, %v649
        %v742 = vpack.c.b16 %v654, %v650
        %v743 = vpack.c.b16 %v655, %v651
        %v744 = vpack.c.b16 %v660, %v656
        %v745 = vpack.c.b16 %v661, %v657
        %v746 = vpack.c.b16 %v662, %v658
        %v747 = vpack.c.b16 %v663, %v659
        %v748 = vpack.c.b16 %v668, %v664
        %v749 = vpack.c.b16 %v669, %v665
        %v750 = vpack.c.b16 %v670, %v666
        %v751 = vpack.c.b16 %v671, %v667
        %v752 = vpack.c.b16 %v676, %v672
        %v753 = vpack.c.b16 %v677, %v673
        %v754 = vpack.c.b16 %v678, %v674
        %v755 = vpack.c.b16 %v679, %v675
        %v756 = vpack.c.b16 %v684, %v680
        %v757 = vpack.c.b16 %v685, %v681
        %v758 = vpack.c.b16 %v686, %v682
        %v759 = vpack.c.b16 %v687, %v683
        %v760 = vpack.c.b16 %v692, %v688
        %v761 = vpack.c.b16 %v693, %v689
        %v762 = vpack.c.b16 %v694, %v690
        %v763 = vpack.c.b16 %v695, %v691
        %v764 = vpack.c.b16 %v700, %v696
        %v765 = vpack.c.b16 %v701, %v697
        %v766 = vpack.c.b16 %v702, %v698
        %v767 = vpack.c.b16 %v703, %v699
        %832 = vmatprep.subr.bf16.mxu0 %v705
        %833 = vmatpush1.bf16.msra.mxu0 %v704
        %834 = vmatprep.subr.bf16.mxu0 %v709
        %835 = vmatpush1.bf16.msra.mxu0 %v708
        %836 = vmatprep.subr.bf16.mxu0 %v713
        %837 = vmatpush1.bf16.msra.mxu0 %v712
        %838 = vmatprep.subr.bf16.mxu0 %v717
        %839 = vmatpush1.bf16.msra.mxu0 %v716
        %840 = vmatprep.subr.bf16.mxu0 %v721
        %841 = vmatpush1.bf16.msra.mxu0 %v720
        %842 = vmatprep.subr.bf16.mxu0 %v725
        %843 = vmatpush1.bf16.msra.mxu0 %v724
        %844 = vmatprep.subr.bf16.mxu0 %v729
        %845 = vmatpush1.bf16.msra.mxu0 %v728
        %846 = vmatprep.subr.bf16.mxu0 %v733
        %847 = vmatpush1.bf16.msra.mxu0 %v732
        %848 = vmatprep.subr.bf16.mxu0 %v737
        %849 = vmatpush1.bf16.msra.mxu0 %v736
        %850 = vmatprep.subr.bf16.mxu0 %v741
        %851 = vmatpush1.bf16.msra.mxu0 %v740
        %852 = vmatprep.subr.bf16.mxu0 %v745
        %853 = vmatpush1.bf16.msra.mxu0 %v744
        %854 = vmatprep.subr.bf16.mxu0 %v749
        %855 = vmatpush1.bf16.msra.mxu0 %v748
        %856 = vmatprep.subr.bf16.mxu0 %v753
        %857 = vmatpush1.bf16.msra.mxu0 %v752
        %858 = vmatprep.subr.bf16.mxu0 %v757
        %859 = vmatpush1.bf16.msra.mxu0 %v756
        %860 = vmatprep.subr.bf16.mxu0 %v761
        %861 = vmatpush1.bf16.msra.mxu0 %v760
        %862 = vmatprep.subr.bf16.mxu0 %v765
        %863 = vmatpush1.bf16.msra.mxu0 %v764
        %864 = vmatprep.mubr.bf16.mxu0 %v425
        %865 = vmatmul.mubr.bf16.gmra.mrb[0].mxu0 %v424
        %v866 = vpop.f32.mrb[0].mxu0
        %v867 = vadd.f32 %v495, %v866
        %v868 = vpop.f32.mrb[0].mxu0
        %v869 = vadd.f32 %v499, %v868
        %v870 = vpop.f32.mrb[0].mxu0
        %v871 = vpop.f32.mrb[0].mxu0
        %872 = vdwg.mxu0
        %873 = vmatprep.subr.bf16.mxu0 %v707
        %874 = vmatpush1.bf16.msra.mxu0 %v706
        %875 = vmatprep.subr.bf16.mxu0 %v711
        %876 = vmatpush1.bf16.msra.mxu0 %v710
        %877 = vmatprep.subr.bf16.mxu0 %v715
        %878 = vmatpush1.bf16.msra.mxu0 %v714
        %879 = vmatprep.subr.bf16.mxu0 %v719
        %880 = vmatpush1.bf16.msra.mxu0 %v718
        %881 = vmatprep.subr.bf16.mxu0 %v723
        %882 = vmatpush1.bf16.msra.mxu0 %v722
        %883 = vmatprep.subr.bf16.mxu0 %v727
        %884 = vmatpush1.bf16.msra.mxu0 %v726
        %885 = vmatprep.subr.bf16.mxu0 %v731
        %886 = vmatpush1.bf16.msra.mxu0 %v730
        %887 = vmatprep.subr.bf16.mxu0 %v735
        %888 = vmatpush1.bf16.msra.mxu0 %v734
        %889 = vmatprep.subr.bf16.mxu0 %v739
        %890 = vmatpush1.bf16.msra.mxu0 %v738
        %891 = vmatprep.subr.bf16.mxu0 %v743
        %892 = vmatpush1.bf16.msra.mxu0 %v742
        %893 = vmatprep.subr.bf16.mxu0 %v747
        %894 = vmatpush1.bf16.msra.mxu0 %v746
        %895 = vmatprep.subr.bf16.mxu0 %v751
        %896 = vmatpush1.bf16.msra.mxu0 %v750
        %897 = vmatprep.subr.bf16.mxu0 %v755
        %898 = vmatpush1.bf16.msra.mxu0 %v754
        %899 = vmatprep.subr.bf16.mxu0 %v759
        %900 = vmatpush1.bf16.msra.mxu0 %v758
        %901 = vmatprep.subr.bf16.mxu0 %v763
        %902 = vmatpush1.bf16.msra.mxu0 %v762
        %903 = vmatprep.subr.bf16.mxu0 %v767
        %904 = vmatpush1.bf16.msra.mxu0 %v766
        %905 = vmatprep.mubr.bf16.mxu0 %v425
        %906 = vmatmul.mubr.bf16.gmra.mrb[0].mxu0 %v424
        %v907 = vpop.f32.mrb[0].mxu0
        %v908 = vadd.f32 %v503, %v907
        %v909 = vpop.f32.mrb[0].mxu0
        %v910 = vadd.f32 %v507, %v909
        %v911 = vpop.f32.mrb[0].mxu0
        %v912 = vpop.f32.mrb[0].mxu0
        %913 = vdwg.mxu0
        %v914 = vmax.f32 %v867, 0.0
        %v915 = vmax.f32 %v869, 0.0
        %v916 = vmax.f32 %v908, 0.0
        %v917 = vmax.f32 %v910, 0.0
        %v918 = vpack.c.bf16 %v914, %v914
        %v919 = vpack.c.bf16 %v915, %v915
        %v920 = vpack.c.bf16 %v916, %v916
        %v921 = vpack.c.bf16 %v917, %v917
        %v922 = vld [vmem:[#allocation8] sm:$0xf]
        %v923 = vld [vmem:[#allocation8 + $0x4] sm:$0xf]
        %v924 = vld [vmem:[#allocation8 + $0x8] sm:$0xf]
        %v925 = vld [vmem:[#allocation8 + $0xc] sm:$0xf]
        %v926 = vld [vmem:[#allocation8 + $0x10] sm:$0xf]
        %v927 = vld [vmem:[#allocation8 + $0x14] sm:$0xf]
        %v928 = vld [vmem:[#allocation8 + $0x18] sm:$0xf]
        %v929 = vld [vmem:[#allocation8 + $0x1c] sm:$0xf]
        %v930 = vld [vmem:[#allocation8 + $0x20] sm:$0xf]
        %v931 = vld [vmem:[#allocation8 + $0x24] sm:$0xf]
        %v932 = vld [vmem:[#allocation8 + $0x28] sm:$0xf]
        %v933 = vld [vmem:[#allocation8 + $0x2c] sm:$0xf]
        %v934 = vld [vmem:[#allocation8 + $0x30] sm:$0xf]
        %v935 = vld [vmem:[#allocation8 + $0x34] sm:$0xf]
        %v936 = vld [vmem:[#allocation8 + $0x38] sm:$0xf]
        %v937 = vld [vmem:[#allocation8 + $0x3c] sm:$0xf]
        %v938 = vld [vmem:[#allocation8 + $0x40] sm:$0xf]
        %v939 = vld [vmem:[#allocation8 + $0x44] sm:$0xf]
        %v940 = vld [vmem:[#allocation8 + $0x48] sm:$0xf]
        %v941 = vld [vmem:[#allocation8 + $0x4c] sm:$0xf]
        %v942 = vld [vmem:[#allocation8 + $0x50] sm:$0xf]
        %v943 = vld [vmem:[#allocation8 + $0x54] sm:$0xf]
        %v944 = vld [vmem:[#allocation8 + $0x58] sm:$0xf]
        %v945 = vld [vmem:[#allocation8 + $0x5c] sm:$0xf]
        %v946 = vld [vmem:[#allocation8 + $0x60] sm:$0xf]
        %v947 = vld [vmem:[#allocation8 + $0x64] sm:$0xf]
        %v948 = vld [vmem:[#allocation8 + $0x68] sm:$0xf]
        %v949 = vld [vmem:[#allocation8 + $0x6c] sm:$0xf]
        %v950 = vld [vmem:[#allocation8 + $0x70] sm:$0xf]
        %v951 = vld [vmem:[#allocation8 + $0x74] sm:$0xf]
        %v952 = vld [vmem:[#allocation8 + $0x78] sm:$0xf]
        %v953 = vld [vmem:[#allocation8 + $0x7c] sm:$0xf]
        %v954 = vld [vmem:[#allocation8 + $0x80] sm:$0xf]
        %v955 = vld [vmem:[#allocation8 + $0x84] sm:$0xf]
        %v956 = vld [vmem:[#allocation8 + $0x88] sm:$0xf]
        %v957 = vld [vmem:[#allocation8 + $0x8c] sm:$0xf]
        %v958 = vld [vmem:[#allocation8 + $0x90] sm:$0xf]
        %v959 = vld [vmem:[#allocation8 + $0x94] sm:$0xf]
        %v960 = vld [vmem:[#allocation8 + $0x98] sm:$0xf]
        %v961 = vld [vmem:[#allocation8 + $0x9c] sm:$0xf]
        %v962 = vld [vmem:[#allocation8 + $0xa0] sm:$0xf]
        %v963 = vld [vmem:[#allocation8 + $0xa4] sm:$0xf]
        %v964 = vld [vmem:[#allocation8 + $0xa8] sm:$0xf]
        %v965 = vld [vmem:[#allocation8 + $0xac] sm:$0xf]
        %v966 = vld [vmem:[#allocation8 + $0xb0] sm:$0xf]
        %v967 = vld [vmem:[#allocation8 + $0xb4] sm:$0xf]
        %v968 = vld [vmem:[#allocation8 + $0xb8] sm:$0xf]
        %v969 = vld [vmem:[#allocation8 + $0xbc] sm:$0xf]
        %v970 = vld [vmem:[#allocation8 + $0xc0] sm:$0xf]
        %v971 = vld [vmem:[#allocation8 + $0xc4] sm:$0xf]
        %v972 = vld [vmem:[#allocation8 + $0xc8] sm:$0xf]
        %v973 = vld [vmem:[#allocation8 + $0xcc] sm:$0xf]
        %v974 = vld [vmem:[#allocation8 + $0xd0] sm:$0xf]
        %v975 = vld [vmem:[#allocation8 + $0xd4] sm:$0xf]
        %v976 = vld [vmem:[#allocation8 + $0xd8] sm:$0xf]
        %v977 = vld [vmem:[#allocation8 + $0xdc] sm:$0xf]
        %v978 = vld [vmem:[#allocation8 + $0xe0] sm:$0xf]
        %v979 = vld [vmem:[#allocation8 + $0xe4] sm:$0xf]
        %v980 = vld [vmem:[#allocation8 + $0xe8] sm:$0xf]
        %v981 = vld [vmem:[#allocation8 + $0xec] sm:$0xf]
        %v982 = vld [vmem:[#allocation8 + $0xf0] sm:$0xf]
        %v983 = vld [vmem:[#allocation8 + $0xf4] sm:$0xf]
        %v984 = vld [vmem:[#allocation8 + $0xf8] sm:$0xf]
        %v985 = vld [vmem:[#allocation8 + $0xfc] sm:$0xf]
        %v986 = vld [vmem:[%s6] sm:$0x1]
        %v988 = vlaneseq
        %v989 = vshrl.u32 %v988, 7
        %v990 = vsub.s32 0, %v989
        %v991 = vrot.slane %v986, %v990
        %v1057 = vunpack.c.l.b16 %v922
        %v1058 = vunpack.c.l.b16 %v923
        %v1059 = vunpack.c.l.b16 %v924
        %v1060 = vunpack.c.l.b16 %v925
        %v1061 = vunpack.c.l.b16 %v926
        %v1062 = vunpack.c.l.b16 %v927
        %v1063 = vunpack.c.l.b16 %v928
        %v1064 = vunpack.c.l.b16 %v929
        %v1065 = vunpack.c.l.b16 %v930
        %v1066 = vunpack.c.l.b16 %v931
        %v1067 = vunpack.c.l.b16 %v932
        %v1068 = vunpack.c.l.b16 %v933
        %v1069 = vunpack.c.l.b16 %v934
        %v1070 = vunpack.c.l.b16 %v935
        %v1071 = vunpack.c.l.b16 %v936
        %v1072 = vunpack.c.l.b16 %v937
        %v1073 = vunpack.c.l.b16 %v938
        %v1074 = vunpack.c.l.b16 %v939
        %v1075 = vunpack.c.l.b16 %v940
        %v1076 = vunpack.c.l.b16 %v941
        %v1077 = vunpack.c.l.b16 %v942
        %v1078 = vunpack.c.l.b16 %v943
        %v1079 = vunpack.c.l.b16 %v944
        %v1080 = vunpack.c.l.b16 %v945
        %v1081 = vunpack.c.l.b16 %v946
        %v1082 = vunpack.c.l.b16 %v947
        %v1083 = vunpack.c.l.b16 %v948
        %v1084 = vunpack.c.l.b16 %v949
        %v1085 = vunpack.c.l.b16 %v950
        %v1086 = vunpack.c.l.b16 %v951
        %v1087 = vunpack.c.l.b16 %v952
        %v1088 = vunpack.c.l.b16 %v953
        %v1089 = vunpack.c.l.b16 %v954
        %v1090 = vunpack.c.l.b16 %v955
        %v1091 = vunpack.c.l.b16 %v956
        %v1092 = vunpack.c.l.b16 %v957
        %v1093 = vunpack.c.l.b16 %v958
        %v1094 = vunpack.c.l.b16 %v959
        %v1095 = vunpack.c.l.b16 %v960
        %v1096 = vunpack.c.l.b16 %v961
        %v1097 = vunpack.c.l.b16 %v962
        %v1098 = vunpack.c.l.b16 %v963
        %v1099 = vunpack.c.l.b16 %v964
        %v1100 = vunpack.c.l.b16 %v965
        %v1101 = vunpack.c.l.b16 %v966
        %v1102 = vunpack.c.l.b16 %v967
        %v1103 = vunpack.c.l.b16 %v968
        %v1104 = vunpack.c.l.b16 %v969
        %v1105 = vunpack.c.l.b16 %v970
        %v1106 = vunpack.c.l.b16 %v971
        %v1107 = vunpack.c.l.b16 %v972
        %v1108 = vunpack.c.l.b16 %v973
        %v1109 = vunpack.c.l.b16 %v974
        %v1110 = vunpack.c.l.b16 %v975
        %v1111 = vunpack.c.l.b16 %v976
        %v1112 = vunpack.c.l.b16 %v977
        %v1113 = vunpack.c.l.b16 %v978
        %v1114 = vunpack.c.l.b16 %v979
        %v1115 = vunpack.c.l.b16 %v980
        %v1116 = vunpack.c.l.b16 %v981
        %v1117 = vunpack.c.l.b16 %v982
        %v1118 = vunpack.c.l.b16 %v983
        %v1119 = vunpack.c.l.b16 %v984
        %v1120 = vunpack.c.l.b16 %v985
        %v1121 = vpack.c.b16 %v1058, %v1057
        %v1122 = vpack.c.b16 %v1060, %v1059
        %v1123 = vpack.c.b16 %v1062, %v1061
        %v1124 = vpack.c.b16 %v1064, %v1063
        %v1125 = vpack.c.b16 %v1066, %v1065
        %v1126 = vpack.c.b16 %v1068, %v1067
        %v1127 = vpack.c.b16 %v1070, %v1069
        %v1128 = vpack.c.b16 %v1072, %v1071
        %v1129 = vpack.c.b16 %v1074, %v1073
        %v1130 = vpack.c.b16 %v1076, %v1075
        %v1131 = vpack.c.b16 %v1078, %v1077
        %v1132 = vpack.c.b16 %v1080, %v1079
        %v1133 = vpack.c.b16 %v1082, %v1081
        %v1134 = vpack.c.b16 %v1084, %v1083
        %v1135 = vpack.c.b16 %v1086, %v1085
        %v1136 = vpack.c.b16 %v1088, %v1087
        %v1137 = vpack.c.b16 %v1090, %v1089
        %v1138 = vpack.c.b16 %v1092, %v1091
        %v1139 = vpack.c.b16 %v1094, %v1093
        %v1140 = vpack.c.b16 %v1096, %v1095
        %v1141 = vpack.c.b16 %v1098, %v1097
        %v1142 = vpack.c.b16 %v1100, %v1099
        %v1143 = vpack.c.b16 %v1102, %v1101
        %v1144 = vpack.c.b16 %v1104, %v1103
        %v1145 = vpack.c.b16 %v1106, %v1105
        %v1146 = vpack.c.b16 %v1108, %v1107
        %v1147 = vpack.c.b16 %v1110, %v1109
        %v1148 = vpack.c.b16 %v1112, %v1111
        %v1149 = vpack.c.b16 %v1114, %v1113
        %v1150 = vpack.c.b16 %v1116, %v1115
        %v1151 = vpack.c.b16 %v1118, %v1117
        %v1152 = vpack.c.b16 %v1120, %v1119
        %1185 = vmatprep.subr.bf16.mxu0 0
        %1186 = vmatpush1.bf16.msra.mxu0 %v1121
        %1187 = vmatprep.subr.bf16.mxu0 0
        %1188 = vmatpush1.bf16.msra.mxu0 %v1122
        %1189 = vmatprep.subr.bf16.mxu0 0
        %1190 = vmatpush1.bf16.msra.mxu0 %v1123
        %1191 = vmatprep.subr.bf16.mxu0 0
        %1192 = vmatpush1.bf16.msra.mxu0 %v1124
        %1193 = vmatprep.subr.bf16.mxu0 0
        %1194 = vmatpush1.bf16.msra.mxu0 %v1125
        %1195 = vmatprep.subr.bf16.mxu0 0
        %1196 = vmatpush1.bf16.msra.mxu0 %v1126
        %1197 = vmatprep.subr.bf16.mxu0 0
        %1198 = vmatpush1.bf16.msra.mxu0 %v1127
        %1199 = vmatprep.subr.bf16.mxu0 0
        %1200 = vmatpush1.bf16.msra.mxu0 %v1128
        %1201 = vmatprep.subr.bf16.mxu0 0
        %1202 = vmatpush1.bf16.msra.mxu0 %v1129
        %1203 = vmatprep.subr.bf16.mxu0 0
        %1204 = vmatpush1.bf16.msra.mxu0 %v1130
        %1205 = vmatprep.subr.bf16.mxu0 0
        %1206 = vmatpush1.bf16.msra.mxu0 %v1131
        %1207 = vmatprep.subr.bf16.mxu0 0
        %1208 = vmatpush1.bf16.msra.mxu0 %v1132
        %1209 = vmatprep.subr.bf16.mxu0 0
        %1210 = vmatpush1.bf16.msra.mxu0 %v1133
        %1211 = vmatprep.subr.bf16.mxu0 0
        %1212 = vmatpush1.bf16.msra.mxu0 %v1134
        %1213 = vmatprep.subr.bf16.mxu0 0
        %1214 = vmatpush1.bf16.msra.mxu0 %v1135
        %1215 = vmatprep.subr.bf16.mxu0 0
        %1216 = vmatpush1.bf16.msra.mxu0 %v1136
        %1217 = vmatprep.mubr.bf16.mxu0 %v919
        %1218 = vmatmul.mubr.bf16.gmra.mrb[0].mxu0 %v918
        %v1219 = vpop.f32.mrb[0].mxu0
        %v1220 = vadd.f32 %v991, %v1219
        %v1221 = vpop.f32.mrb[0].mxu0
        %v1222 = vpop.f32.mrb[0].mxu0
        %v1223 = vpop.f32.mrb[0].mxu0
        %1224 = vdwg.mxu0
        %1225 = vmatprep.subr.bf16.mxu0 0
        %1226 = vmatpush1.bf16.msra.mxu0 %v1137
        %1227 = vmatprep.subr.bf16.mxu0 0
        %1228 = vmatpush1.bf16.msra.mxu0 %v1138
        %1229 = vmatprep.subr.bf16.mxu0 0
        %1230 = vmatpush1.bf16.msra.mxu0 %v1139
        %1231 = vmatprep.subr.bf16.mxu0 0
        %1232 = vmatpush1.bf16.msra.mxu0 %v1140
        %1233 = vmatprep.subr.bf16.mxu0 0
        %1234 = vmatpush1.bf16.msra.mxu0 %v1141
        %1235 = vmatprep.subr.bf16.mxu0 0
        %1236 = vmatpush1.bf16.msra.mxu0 %v1142
        %1237 = vmatprep.subr.bf16.mxu0 0
        %1238 = vmatpush1.bf16.msra.mxu0 %v1143
        %1239 = vmatprep.subr.bf16.mxu0 0
        %1240 = vmatpush1.bf16.msra.mxu0 %v1144
        %1241 = vmatprep.subr.bf16.mxu0 0
        %1242 = vmatpush1.bf16.msra.mxu0 %v1145
        %1243 = vmatprep.subr.bf16.mxu0 0
        %1244 = vmatpush1.bf16.msra.mxu0 %v1146
        %1245 = vmatprep.subr.bf16.mxu0 0
        %1246 = vmatpush1.bf16.msra.mxu0 %v1147
        %1247 = vmatprep.subr.bf16.mxu0 0
        %1248 = vmatpush1.bf16.msra.mxu0 %v1148
        %1249 = vmatprep.subr.bf16.mxu0 0
        %1250 = vmatpush1.bf16.msra.mxu0 %v1149
        %1251 = vmatprep.subr.bf16.mxu0 0
        %1252 = vmatpush1.bf16.msra.mxu0 %v1150
        %1253 = vmatprep.subr.bf16.mxu0 0
        %1254 = vmatpush1.bf16.msra.mxu0 %v1151
        %1255 = vmatprep.subr.bf16.mxu0 0
        %1256 = vmatpush1.bf16.msra.mxu0 %v1152
        %1257 = vmatprep.mubr.bf16.mxu0 %v921
        %1258 = vmatmul.mubr.bf16.gmra.mrb[0].mxu0 %v920
        %v1259 = vpop.f32.mrb[0].mxu0
        %v1260 = vadd.f32 %v1220, %v1259
        %v1261 = vpop.f32.mrb[0].mxu0
        %v1262 = vpop.f32.mrb[0].mxu0
        %v1263 = vpop.f32.mrb[0].mxu0
        %1264 = vdwg.mxu0
        %1265 = vst [vmem:[%s337] sm:$0xff] %v1260
        %s1266 = sand.u32 %s186, 1
        %s1267 = scalar_lea.sflag [#allocation4], %s1266
        %s1268 = sand.u32 %s186, 1
        %s1269 = smul.addr %s1268, 8
        %s1270 = scalar_lea.vmem [#allocation10], %s1269
        // Predicated region
        $region65: #{tpu_custom_call.1} parent=47 // pred_check
          %p1271 = pneg %p196
        $region66: #{tpu_custom_call.1} parent=47 // pred_check_branch
          %1273 = sbr.rel (%p1271) target = $region68
        $region67: #{tpu_custom_call.1} parent=47 // pred_region
          %s1275 = ssub.s32 128, 128
          %1276 = vsyncadd %s1267, %s1275
          %s1277 = smul.addr %s26, 128
          %s1278 = scalar_lea.hbm %s7, %s1277
          %s1280 = sshll.u32 %s1270, 4
          %s1281 = int_to_ptr.vmem [resolvable:$true] %s1280
          %1283 = dma.vmem_to_hbm [thread:$0]  %s1281, 128, %s1278, %s1267
        $region68: #{tpu_custom_call.1} parent=47 // pred_fallthru
          _
      $region48: #{tpu_custom_call.1} parent=5 // pred_fallthru
        _
      %p1284 = scmp.le.s32.totalorder 2, %s21
      // Predicated region
      $region69: #{tpu_custom_call.1} parent=5 // pred_check
        %p1285 = pneg %p1284
      $region70: #{tpu_custom_call.1} parent=5 // pred_check_branch
        %1287 = sbr.rel (%p1285) target = $region72
      $region71: #{tpu_custom_call.1} parent=5 // pred_region
        %s1288 = ssub.s32 %s21, 2
        // Predicated region
        $region73: #{tpu_custom_call.1} parent=71 // pred_check
          %p1289 = pneg %p202
        $region74: #{tpu_custom_call.1} parent=71 // pred_check_branch
          %1291 = sbr.rel (%p1289) target = $region76
        $region75: #{tpu_custom_call.1} parent=71 // pred_region
          %s1292 = sand.u32 %s187, 1
          %s1293 = scalar_lea.sflag [#allocation4], %s1292
          %s1294 = sand.u32 %s187, 1
          %s1295 = smul.addr %s1294, 8
          %s1296 = scalar_lea.vmem [#allocation10], %s1295
          %1297 = dma.done %s1293, 128
        $region76: #{tpu_custom_call.1} parent=71 // pred_fallthru
          _
      $region72: #{tpu_custom_call.1} parent=5 // pred_fallthru
        _
    $region6: #{tpu_custom_call.1} parent=1 // loop_footer
      %s25 = sadd.s32 1, %s21
    $region7: #{tpu_custom_call.1} parent=1 // loop_footer_branch
      %20 = sbr.rel target = $region3
    $region8: #{tpu_custom_call.1} parent=1 // loop_exit
      _
    %1298 = vsyncpa [#allocation3], 1
    %s1299 = scalar_lea.sflag [#allocation3], 1
    %1300 = vsyncpa %s1299, 1
    %1301 = vsyncpa [#allocation6], 1
    %1302 = vsyncpa [#allocation9], 1
    %1303 = vsyncpa [#allocation4], 1
    %s1304 = scalar_lea.sflag [#allocation4], 1
    %1305 = vsyncpa %s1304, 1

// kernel: tpu_custom_call.1
$region0: #{tpu_custom_call.1}
  #allocation0 [shape = 'u32[]', space=smem, size = 0x4, offset = 0x4, fixed_abs, tag = 'smem constant byte address 0x4 - core index']
  #allocation1 [shape = 'u32[144,128]{1,0:T(1,128)}', space=vmem, size = 0x12000, scoped, tag = 'internal scratch']
  %s0 = inlined_call_operand.hbm [shape: f32[16,32], index: 0, kind: input, shape index: {}]
  %s1 = inlined_call_operand.hbm [shape: bf16[32,256], index: 1, kind: input, shape index: {}]
  %s2 = inlined_call_operand.vmem [shape: f32[1,256], index: 2, kind: input, shape index: {}]
  %s3 = inlined_call_operand.hbm [shape: bf16[256,512], index: 3, kind: input, shape index: {}]
  %s4 = inlined_call_operand.vmem [shape: f32[1,512], index: 4, kind: input, shape index: {}]
  %s5 = inlined_call_operand.hbm [shape: bf16[512,128], index: 5, kind: input, shape index: {}]
  %s6 = inlined_call_operand.vmem [shape: f32[1,128], index: 6, kind: input, shape index: {}]
  %s7 = inlined_call_operand.hbm [shape: f32[16,128], index: 7, kind: output, shape index: {}]
  %s8 = sld [smem:[#allocation0]]
  $region77: #{tpu_custom_call.1} parent=0
    _
  %s10 = ssub.s32 1, %s8
  %s11 = scalar_select 0, %s10, %s8
  $region1: #{tpu_custom_call.1} parent=0
    #allocation2 [shape = 'u8[8192]{0}', space=vmem, size = 0x2000, scoped, tag = 'input window, operand 0']
    #allocation3 [shape = 's32[2]{0}', space=sflag, size = 0x8, scoped, tag = 'scoped memory for tpu_custom_call.1']
    #allocation4 [shape = 's32[2]{0}', space=sflag, size = 0x8, scoped, tag = 'scoped memory for tpu_custom_call.1']
    #allocation5 [shape = 'u8[16384]{0}', space=vmem, size = 0x4000, scoped, tag = 'input window, operand 1, single buffered']
    #allocation6 [shape = 's32[1]{0}', space=sflag, size = 0x4, scoped, tag = 'scoped memory for tpu_custom_call.1']
    #allocation7 [shape = 'u8[262144]{0}', space=vmem, size = 0x40000, scoped, tag = 'input window, operand 3, single buffered']
    #allocation8 [shape = 'u8[131072]{0}', space=vmem, size = 0x20000, scoped, tag = 'input window, operand 5, single buffered']
    #allocation9 [shape = 's32[1]{0}', space=sflag, size = 0x4, scoped, tag = 'scoped memory for tpu_custom_call.1']
    #allocation10 [shape = 'u8[8192]{0}', space=vmem, size = 0x2000, scoped, tag = 'output window, operand 0']
    %12 = vsyncpa [#allocation3], 0
    %s13 = scalar_lea.sflag [#allocation3], 1
    %14 = vsyncpa %s13, 0
    %15 = vsyncpa [#allocation6], 0
    %16 = vsyncpa [#allocation9], 0
    %17 = vsyncpa [#allocation4], 0
    %s18 = scalar_lea.sflag [#allocation4], 1
    %19 = vsyncpa %s18, 0
    loop: start=0, step=1, limit=4
    $region2: #{tpu_custom_call.1} parent=1 // loop_pre_header
      _
    $region3: #{tpu_custom_call.1} parent=1 // loop_header
      %s21 = sphi 0, %s25
      %p22 = scmp.ge.s32.totalorder %s21, 4
      %s31 = sphi 0, %s33
      %s34 = sphi 0, %s31
      %s35 = sphi 0, %s34
      %s51 = sphi 0, %s35
      %s55 = sphi 0, %s55
      %s57 = sphi 0, %s55
      %s58 = sphi 0, %s57
      %s72 = sphi 0, %s58
      %s76 = sphi 0, %s76
      %s78 = sphi 0, %s76
      %s79 = sphi 0, %s78
      %s93 = sphi 0, %s79
      %s97 = sphi 0, %s97
      %s99 = sphi 0, %s97
      %s100 = sphi 0, %s99
      %s114 = sphi 0, %s100
      %s118 = sphi 0, %s118
      %s120 = sphi 0, %s118
      %s121 = sphi 0, %s120
      %s135 = sphi 0, %s121
      %s139 = sphi 0, %s139
      %s141 = sphi 0, %s139
      %s142 = sphi 0, %s141
      %s156 = sphi 0, %s142
      %s160 = sphi 0, %s160
      %s162 = sphi 0, %s160
      %s163 = sphi 0, %s162
      %s177 = sphi 0, %s163
      %s183 = sphi 0, %s185
      %s186 = sphi 0, %s183
      %s187 = sphi 0, %s186
      %s203 = sphi 0, %s187
    $region4: #{tpu_custom_call.1} parent=1 // loop_header_branch
      %24 = sbr.rel (%p22) target = $region8
    $region5: #{tpu_custom_call.1} parent=1 // loop_body
      %s26 = ssub.s32 %s21, 1
      %s27 = ssub.s32 %s21, 2
      %s28 = sadd.s32 %s21, 1
      %s29 = ssub.s32 %s21, %s28
      %p30 = scmp.eq.s32.totalorder %s29, 0
      %s32 = sadd.s32 %s31, 1
      %s33 = scalar_select %p30, %s31, %s32
      %p36 = pneg %p30
      %p37 = scmp.eq.s32.totalorder %s21, 1
      %p38 = por %p36, %p37
      %p39 = scmp.ne.s32.totalorder %s31, %s34
      %p40 = scmp.eq.s32.totalorder %s21, 0
      %p41 = por %p39, %p40
      %p42 = scmp.ne.s32.totalorder %s31, %s34
      %p43 = scmp.eq.s32.totalorder %s26, 1
      %p44 = por %p42, %p43
      %p45 = scmp.ne.s32.totalorder %s34, %s35
      %p46 = scmp.eq.s32.totalorder %s26, 0
      %p47 = por %p45, %p46
      %p48 = scmp.ne.s32.totalorder %s34, %s35
      %p49 = scmp.eq.s32.totalorder %s27, 1
      %p50 = por %p48, %p49
      %p52 = scmp.ne.s32.totalorder %s35, %s51
      %p53 = scmp.eq.s32.totalorder %s27, 0
      %p54 = por %p52, %p53
      %s56 = sadd.s32 %s55, 1
      %p59 = scmp.eq.s32.totalorder %s21, 1
      %p60 = scmp.ne.s32.totalorder %s55, %s57
      %p61 = scmp.eq.s32.totalorder %s21, 0
      %p62 = por %p60, %p61
      %p63 = scmp.ne.s32.totalorder %s55, %s57
      %p64 = scmp.eq.s32.totalorder %s26, 1
      %p65 = por %p63, %p64
      %p66 = scmp.ne.s32.totalorder %s57, %s58
      %p67 = scmp.eq.s32.totalorder %s26, 0
      %p68 = por %p66, %p67
      %p69 = scmp.ne.s32.totalorder %s57, %s58
      %p70 = scmp.eq.s32.totalorder %s27, 1
      %p71 = por %p69, %p70
      %p73 = scmp.ne.s32.totalorder %s58, %s72
      %p74 = scmp.eq.s32.totalorder %s27, 0
      %p75 = por %p73, %p74
      %s77 = sadd.s32 %s76, 1
      %p80 = scmp.eq.s32.totalorder %s21, 1
      %p81 = scmp.ne.s32.totalorder %s76, %s78
      %p82 = scmp.eq.s32.totalorder %s21, 0
      %p83 = por %p81, %p82
      %p84 = scmp.ne.s32.totalorder %s76, %s78
      %p85 = scmp.eq.s32.totalorder %s26, 1
      %p86 = por %p84, %p85
      %p87 = scmp.ne.s32.totalorder %s78, %s79
      %p88 = scmp.eq.s32.totalorder %s26, 0
      %p89 = por %p87, %p88
      %p90 = scmp.ne.s32.totalorder %s78, %s79
      %p91 = scmp.eq.s32.totalorder %s27, 1
      %p92 = por %p90, %p91
      %p94 = scmp.ne.s32.totalorder %s79, %s93
      %p95 = scmp.eq.s32.totalorder %s27, 0
      %p96 = por %p94, %p95
      %s98 = sadd.s32 %s97, 1
      %p101 = scmp.eq.s32.totalorder %s21, 1
      %p102 = scmp.ne.s32.totalorder %s97, %s99
      %p103 = scmp.eq.s32.totalorder %s21, 0
      %p104 = por %p102, %p103
      %p105 = scmp.ne.s32.totalorder %s97, %s99
      %p106 = scmp.eq.s32.totalorder %s26, 1
      %p107 = por %p105, %p106
      %p108 = scmp.ne.s32.totalorder %s99, %s100
      %p109 = scmp.eq.s32.totalorder %s26, 0
      %p110 = por %p108, %p109
      %p111 = scmp.ne.s32.totalorder %s99, %s100
      %p112 = scmp.eq.s32.totalorder %s27, 1
      %p113 = por %p111, %p112
      %p115 = scmp.ne.s32.totalorder %s100, %s114
      %p116 = scmp.eq.s32.totalorder %s27, 0
      %p117 = por %p115, %p116
      %s119 = sadd.s32 %s118, 1
      %p122 = scmp.eq.s32.totalorder %s21, 1
      %p123 = scmp.ne.s32.totalorder %s118, %s120
      %p124 = scmp.eq.s32.totalorder %s21, 0
      %p125 = por %p123, %p124
      %p126 = scmp.ne.s32.totalorder %s118, %s120
      %p127 = scmp.eq.s32.totalorder %s26, 1
      %p128 = por %p126, %p127
      %p129 = scmp.ne.s32.totalorder %s120, %s121
      %p130 = scmp.eq.s32.totalorder %s26, 0
      %p131 = por %p129, %p130
      %p132 = scmp.ne.s32.totalorder %s120, %s121
      %p133 = scmp.eq.s32.totalorder %s27, 1
      %p134 = por %p132, %p133
      %p136 = scmp.ne.s32.totalorder %s121, %s135
      %p137 = scmp.eq.s32.totalorder %s27, 0
      %p138 = por %p136, %p137
      %s140 = sadd.s32 %s139, 1
      %p143 = scmp.eq.s32.totalorder %s21, 1
      %p144 = scmp.ne.s32.totalorder %s139, %s141
      %p145 = scmp.eq.s32.totalorder %s21, 0
      %p146 = por %p144, %p145
      %p147 = scmp.ne.s32.totalorder %s139, %s141
      %p148 = scmp.eq.s32.totalorder %s26, 1
      %p149 = por %p147, %p148
      %p150 = scmp.ne.s32.totalorder %s141, %s142
      %p151 = scmp.eq.s32.totalorder %s26, 0
      %p152 = por %p150, %p151
      %p153 = scmp.ne.s32.totalorder %s141, %s142
      %p154 = scmp.eq.s32.totalorder %s27, 1
      %p155 = por %p153, %p154
      %p157 = scmp.ne.s32.totalorder %s142, %s156
      %p158 = scmp.eq.s32.totalorder %s27, 0
      %p159 = por %p157, %p158
      %s161 = sadd.s32 %s160, 1
      %p164 = scmp.eq.s32.totalorder %s21, 1
      %p165 = scmp.ne.s32.totalorder %s160, %s162
      %p166 = scmp.eq.s32.totalorder %s21, 0
      %p167 = por %p165, %p166
      %p168 = scmp.ne.s32.totalorder %s160, %s162
      %p169 = scmp.eq.s32.totalorder %s26, 1
      %p170 = por %p168, %p169
      %p171 = scmp.ne.s32.totalorder %s162, %s163
      %p172 = scmp.eq.s32.totalorder %s26, 0
      %p173 = por %p171, %p172
      %p174 = scmp.ne.s32.totalorder %s162, %s163
      %p175 = scmp.eq.s32.totalorder %s27, 1
      %p176 = por %p174, %p175
      %p178 = scmp.ne.s32.totalorder %s163, %s177
      %p179 = scmp.eq.s32.totalorder %s27, 0
      %p180 = por %p178, %p179
      %s181 = ssub.s32 %s21, %s28
      %p182 = scmp.eq.s32.totalorder %s181, 0
      %s184 = sadd.s32 %s183, 1
      %s185 = scalar_select %p182, %s183, %s184
      %p188 = pneg %p182
      %p189 = scmp.eq.s32.totalorder %s21, 1
      %p190 = por %p188, %p189
      %p191 = scmp.ne.s32.totalorder %s183, %s186
      %p192 = scmp.eq.s32.totalorder %s21, 0
      %p193 = por %p191, %p192
      %p194 = scmp.ne.s32.totalorder %s183, %s186
      %p195 = scmp.eq.s32.totalorder %s26, 1
      %p196 = por %p194, %p195
      %p197 = scmp.ne.s32.totalorder %s186, %s187
      %p198 = scmp.eq.s32.totalorder %s26, 0
      %p199 = por %p197, %p198
      %p200 = scmp.ne.s32.totalorder %s186, %s187
      %p201 = scmp.eq.s32.totalorder %s27, 1
      %p202 = por %p200, %p201
      %p204 = scmp.ne.s32.totalorder %s187, %s203
      %p205 = scmp.eq.s32.totalorder %s27, 0
      %p206 = por %p204, %p205
      %p207 = scmp.le.s32.totalorder 1, %s21
      %p208 = scmp.lt.s32.totalorder %s21, 3
      %p209 = pnand %p207, %p208
      %p210 = pneg %p209
      // Predicated region
      $region9: #{tpu_custom_call.1} parent=5 // pred_check
        _
      $region10: #{tpu_custom_call.1} parent=5 // pred_check_branch
        %212 = sbr.rel (%p209) target = $region12
      $region11: #{tpu_custom_call.1} parent=5 // pred_region
        %s213 = ssub.s32 %s21, 1
        // Predicated region
        $region13: #{tpu_custom_call.1} parent=11 // pred_check
          %p214 = pneg %p68
        $region14: #{tpu_custom_call.1} parent=11 // pred_check_branch
          %216 = sbr.rel (%p214) target = $region16
        $region15: #{tpu_custom_call.1} parent=11 // pred_region
          %s218 = ssub.s32 512, 512
          %219 = vsyncadd [#allocation6], %s218
          %s220 = sshll.u32 [#allocation5], 4
          %s221 = int_to_ptr.vmem [resolvable:$true] %s220
          %226 = dma.hbm_to_vmem [thread:$0]  %s1, 512, %s221, [#allocation6], 128, 128, 8
        $region16: #{tpu_custom_call.1} parent=11 // pred_fallthru
          _
        // Predicated region
        $region17: #{tpu_custom_call.1} parent=11 // pred_check
          %p227 = pneg %p89
        $region18: #{tpu_custom_call.1} parent=11 // pred_check_branch
          %229 = sbr.rel (%p227) target = $region20
        $region19: #{tpu_custom_call.1} parent=11 // pred_region
          _
        $region20: #{tpu_custom_call.1} parent=11 // pred_fallthru
          _
        // Predicated region
        $region21: #{tpu_custom_call.1} parent=11 // pred_check
          %p230 = pneg %p110
        $region22: #{tpu_custom_call.1} parent=11 // pred_check_branch
          %232 = sbr.rel (%p230) target = $region24
        $region23: #{tpu_custom_call.1} parent=11 // pred_region
          %s234 = ssub.s32 8192, 8192
          %235 = vsyncadd [#allocation6], %s234
          %s236 = sshll.u32 [#allocation7], 4
          %s237 = int_to_ptr.vmem [resolvable:$true] %s236
          %242 = dma.hbm_to_vmem [thread:$0]  %s3, 8192, %s237, [#allocation6], 256, 256, 16
        $region24: #{tpu_custom_call.1} parent=11 // pred_fallthru
          _
        // Predicated region
        $region25: #{tpu_custom_call.1} parent=11 // pred_check
          %p243 = pneg %p131
        $region26: #{tpu_custom_call.1} parent=11 // pred_check_branch
          %245 = sbr.rel (%p243) target = $region28
        $region27: #{tpu_custom_call.1} parent=11 // pred_region
          _
        $region28: #{tpu_custom_call.1} parent=11 // pred_fallthru
          _
        // Predicated region
        $region29: #{tpu_custom_call.1} parent=11 // pred_check
          %p246 = pneg %p152
        $region30: #{tpu_custom_call.1} parent=11 // pred_check_branch
          %248 = sbr.rel (%p246) target = $region32
        $region31: #{tpu_custom_call.1} parent=11 // pred_region
          %s250 = ssub.s32 4096, 4096
          %251 = vsyncadd [#allocation9], %s250
          %s252 = sshll.u32 [#allocation8], 4
          %s253 = int_to_ptr.vmem [resolvable:$true] %s252
          %258 = dma.hbm_to_vmem [thread:$0]  %s5, 4096, %s253, [#allocation9], 64, 64, 4
        $region32: #{tpu_custom_call.1} parent=11 // pred_fallthru
          _
        // Predicated region
        $region33: #{tpu_custom_call.1} parent=11 // pred_check
          %p259 = pneg %p173
        $region34: #{tpu_custom_call.1} parent=11 // pred_check_branch
          %261 = sbr.rel (%p259) target = $region36
        $region35: #{tpu_custom_call.1} parent=11 // pred_region
          _
        $region36: #{tpu_custom_call.1} parent=11 // pred_fallthru
          _
      $region12: #{tpu_custom_call.1} parent=5 // pred_fallthru
        _
      %p262 = scmp.lt.s32.totalorder %s21, 2
      // Predicated region
      $region37: #{tpu_custom_call.1} parent=5 // pred_check
        %p263 = pneg %p262
      $region38: #{tpu_custom_call.1} parent=5 // pred_check_branch
        %265 = sbr.rel (%p263) target = $region40
      $region39: #{tpu_custom_call.1} parent=5 // pred_region
        // Predicated region
        $region41: #{tpu_custom_call.1} parent=39 // pred_check
          %p266 = pneg %p41
        $region42: #{tpu_custom_call.1} parent=39 // pred_check_branch
          %268 = sbr.rel (%p266) target = $region44
        $region43: #{tpu_custom_call.1} parent=39 // pred_region
          %s269 = sand.u32 %s31, 1
          %s270 = scalar_lea.sflag [#allocation3], %s269
          %s271 = sand.u32 %s31, 1
          %s272 = smul.addr %s271, 8
          %s273 = scalar_lea.vmem [#allocation2], %s272
          %s275 = ssub.s32 128, 128
          %276 = vsyncadd %s270, %s275
          %s277 = smul.addr %s21, 128
          %s278 = scalar_lea.hbm %s0, %s277
          %s280 = sshll.u32 %s273, 4
          %s281 = int_to_ptr.vmem [resolvable:$true] %s280
          %283 = dma.hbm_to_vmem [thread:$0]  %s278, 128, %s281, %s270
        $region44: #{tpu_custom_call.1} parent=39 // pred_fallthru
          _
      $region40: #{tpu_custom_call.1} parent=5 // pred_fallthru
        _
      %p284 = scmp.le.s32.totalorder 1, %s21
      %p285 = scmp.lt.s32.totalorder %s21, 3
      %p286 = pnand %p284, %p285
      %p287 = pneg %p286
      // Predicated region
      $region45: #{tpu_custom_call.1} parent=5 // pred_check
        _
      $region46: #{tpu_custom_call.1} parent=5 // pred_check_branch
        %289 = sbr.rel (%p286) target = $region48
      $region47: #{tpu_custom_call.1} parent=5 // pred_region
        %s290 = ssub.s32 %s21, 1
        %s291 = sand.u32 %s34, 1
        %s292 = scalar_lea.sflag [#allocation3], %s291
        %s293 = sand.u32 %s34, 1
        %s294 = smul.addr %s293, 8
        %s295 = scalar_lea.vmem [#allocation2], %s294
        // Predicated region
        $region49: #{tpu_custom_call.1} parent=47 // pred_check
          %p296 = pneg %p47
        $region50: #{tpu_custom_call.1} parent=47 // pred_check_branch
          %298 = sbr.rel (%p296) target = $region52
        $region51: #{tpu_custom_call.1} parent=47 // pred_region
          %299 = dma.done %s292, 128
        $region52: #{tpu_custom_call.1} parent=47 // pred_fallthru
          _
        // Predicated region
        $region53: #{tpu_custom_call.1} parent=47 // pred_check
          %p300 = pneg %p68
        $region54: #{tpu_custom_call.1} parent=47 // pred_check_branch
          %302 = sbr.rel (%p300) target = $region56
        $region55: #{tpu_custom_call.1} parent=47 // pred_region
          %303 = dma.done [#allocation6], 512
        $region56: #{tpu_custom_call.1} parent=47 // pred_fallthru
          _
        // Predicated region
        $region57: #{tpu_custom_call.1} parent=47 // pred_check
          %p304 = pneg %p110
        $region58: #{tpu_custom_call.1} parent=47 // pred_check_branch
          %306 = sbr.rel (%p304) target = $region60
        $region59: #{tpu_custom_call.1} parent=47 // pred_region
          %307 = dma.done [#allocation6], 8192
        $region60: #{tpu_custom_call.1} parent=47 // pred_fallthru
          _
        // Predicated region
        $region61: #{tpu_custom_call.1} parent=47 // pred_check
          %p308 = pneg %p152
        $region62: #{tpu_custom_call.1} parent=47 // pred_check_branch
          %310 = sbr.rel (%p308) target = $region64
        $region63: #{tpu_custom_call.1} parent=47 // pred_region
          %311 = dma.done [#allocation9], 4096
        $region64: #{tpu_custom_call.1} parent=47 // pred_fallthru
          _
        %s312 = sand.u32 %s34, 1
        %s313 = scalar_lea.sflag [#allocation3], %s312
        %s314 = sand.u32 %s34, 1
        %s315 = smul.addr %s314, 8
        %s316 = scalar_lea.vmem [#allocation2], %s315
        %p317 = pneg %p47
        %p318 = pneg %p44
        %p319 = pneg %p68
        %p320 = pneg %p65
        %p321 = pneg %p89
        %p322 = pneg %p86
        %p323 = pneg %p110
        %p324 = pneg %p107
        %p325 = pneg %p131
        %p326 = pneg %p128
        %p327 = pneg %p152
        %p328 = pneg %p149
        %p329 = pneg %p173
        %p330 = pneg %p170
        %p331 = pneg %p199
        %p332 = pneg %p196
        %s333 = sand.u32 %s186, 1
        %s334 = scalar_lea.sflag [#allocation4], %s333
        %s335 = sand.u32 %s186, 1
        %s336 = smul.addr %s335, 8
        %s337 = scalar_lea.vmem [#allocation10], %s336
        %v339 = vld [vmem:[%s295] sm:$0xff]
        %v340 = vpack.c.bf16 %v339, %v339
        %v341 = vld [vmem:[#allocation5] sm:$0xff]
        %v342 = vld [vmem:[#allocation5 + $0x8] sm:$0xff]
        %v343 = vld [vmem:[#allocation5 + $0x10] sm:$0xff]
        %v344 = vld [vmem:[#allocation5 + $0x18] sm:$0xff]
        %v345 = vld [vmem:[%s2] sm:$0x3]
        %v347 = vlaneseq
        %v348 = vshrl.u32 %v347, 7
        %v349 = vsub.s32 0, %v348
        %v350 = vrot.slane %v345, %v349
        %v351 = vlaneseq
        %v352 = vshrl.u32 %v351, 7
        %v353 = vsub.s32 1, %v352
        %v354 = vrot.slane %v345, %v353
        %v361 = vunpack.c.l.b16 %v341
        %v362 = vunpack.c.h.b16 %v341
        %v363 = vunpack.c.l.b16 %v342
        %v364 = vunpack.c.h.b16 %v342
        %v365 = vunpack.c.l.b16 %v343
        %v366 = vunpack.c.h.b16 %v343
        %v367 = vunpack.c.l.b16 %v344
        %v368 = vunpack.c.h.b16 %v344
        %v369 = vpack.c.b16 %v363, %v361
        %v370 = vpack.c.b16 %v364, %v362
        %v371 = vpack.c.b16 %v367, %v365
        %v372 = vpack.c.b16 %v368, %v366
        %vm377 = vcmask 261120
        %v379 = vsel %vm377, %v340, 0
        %381 = vmatprep.subr.bf16.mxu0 %v370
        %382 = vmatpush1.bf16.msra.mxu0 %v369
        %383 = vmatprep.subr.bf16.mxu0 %v372
        %384 = vmatpush1.bf16.msra.mxu0 %v371
        %385 = vmatprep.subr.bf16.mxu0 0
        %386 = vmatpush1.bf16.msra.mxu0 0
        %387 = vmatprep.subr.bf16.mxu0 0
        %388 = vmatpush1.bf16.msra.mxu0 0
        %389 = vmatprep.subr.bf16.mxu0 0
        %390 = vmatpush1.bf16.msra.mxu0 0
        %391 = vmatprep.subr.bf16.mxu0 0
        %392 = vmatpush1.bf16.msra.mxu0 0
        %393 = vmatprep.subr.bf16.mxu0 0
        %394 = vmatpush1.bf16.msra.mxu0 0
        %395 = vmatprep.subr.bf16.mxu0 0
        %396 = vmatpush1.bf16.msra.mxu0 0
        %397 = vmatprep.subr.bf16.mxu0 0
        %398 = vmatpush1.bf16.msra.mxu0 0
        %399 = vmatprep.subr.bf16.mxu0 0
        %400 = vmatpush1.bf16.msra.mxu0 0
        %401 = vmatprep.subr.bf16.mxu0 0
        %402 = vmatpush1.bf16.msra.mxu0 0
        %403 = vmatprep.subr.bf16.mxu0 0
        %404 = vmatpush1.bf16.msra.mxu0 0
        %405 = vmatprep.subr.bf16.mxu0 0
        %406 = vmatpush1.bf16.msra.mxu0 0
        %407 = vmatprep.subr.bf16.mxu0 0
        %408 = vmatpush1.bf16.msra.mxu0 0
        %409 = vmatprep.subr.bf16.mxu0 0
        %410 = vmatpush1.bf16.msra.mxu0 0
        %411 = vmatprep.subr.bf16.mxu0 0
        %412 = vmatpush1.bf16.msra.mxu0 0
        %413 = vmatprep.mubr.bf16.mxu0 0
        %414 = vmatmul.mubr.bf16.gmra.mrb[0].mxu0 %v379
        %v415 = vpop.f32.mrb[0].mxu0
        %v416 = vadd.f32 %v350, %v415
        %v417 = vpop.f32.mrb[0].mxu0
        %v418 = vadd.f32 %v354, %v417
        %v419 = vpop.f32.mrb[0].mxu0
        %v420 = vpop.f32.mrb[0].mxu0
        %421 = vdwg.mxu0
        %v422 = vmax.f32 %v416, 0.0
        %v423 = vmax.f32 %v418, 0.0
        %v424 = vpack.c.bf16 %v422, %v422
        %v425 = vpack.c.bf16 %v423, %v423
        %v426 = vld [vmem:[#allocation7] sm:$0xff]
        %v427 = vld [vmem:[#allocation7 + $0x8] sm:$0xff]
        %v428 = vld [vmem:[#allocation7 + $0x10] sm:$0xff]
        %v429 = vld [vmem:[#allocation7 + $0x18] sm:$0xff]
        %v430 = vld [vmem:[#allocation7 + $0x20] sm:$0xff]
        %v431 = vld [vmem:[#allocation7 + $0x28] sm:$0xff]
        %v432 = vld [vmem:[#allocation7 + $0x30] sm:$0xff]
        %v433 = vld [vmem:[#allocation7 + $0x38] sm:$0xff]
        %v434 = vld [vmem:[#allocation7 + $0x40] sm:$0xff]
        %v435 = vld [vmem:[#allocation7 + $0x48] sm:$0xff]
        %v436 = vld [vmem:[#allocation7 + $0x50] sm:$0xff]
        %v437 = vld [vmem:[#allocation7 + $0x58] sm:$0xff]
        %v438 = vld [vmem:[#allocation7 + $0x60] sm:$0xff]
        %v439 = vld [vmem:[#allocation7 + $0x68] sm:$0xff]
        %v440 = vld [vmem:[#allocation7 + $0x70] sm:$0xff]
        %v441 = vld [vmem:[#allocation7 + $0x78] sm:$0xff]
        %v442 = vld [vmem:[#allocation7 + $0x80] sm:$0xff]
        %v443 = vld [vmem:[#allocation7 + $0x88] sm:$0xff]
        %v444 = vld [vmem:[#allocation7 + $0x90] sm:$0xff]
        %v445 = vld [vmem:[#allocation7 + $0x98] sm:$0xff]
        %v446 = vld [vmem:[#allocation7 + $0xa0] sm:$0xff]
        %v447 = vld [vmem:[#allocation7 + $0xa8] sm:$0xff]
        %v448 = vld [vmem:[#allocation7 + $0xb0] sm:$0xff]
        %v449 = vld [vmem:[#allocation7 + $0xb8] sm:$0xff]
        %v450 = vld [vmem:[#allocation7 + $0xc0] sm:$0xff]
        %v451 = vld [vmem:[#allocation7 + $0xc8] sm:$0xff]
        %v452 = vld [vmem:[#allocation7 + $0xd0] sm:$0xff]
        %v453 = vld [vmem:[#allocation7 + $0xd8] sm:$0xff]
        %v454 = vld [vmem:[#allocation7 + $0xe0] sm:$0xff]
        %v455 = vld [vmem:[#allocation7 + $0xe8] sm:$0xff]
        %v456 = vld [vmem:[#allocation7 + $0xf0] sm:$0xff]
        %v457 = vld [vmem:[#allocation7 + $0xf8] sm:$0xff]
        %v458 = vld [vmem:[#allocation7 + $0x100] sm:$0xff]
        %v459 = vld [vmem:[#allocation7 + $0x108] sm:$0xff]
        %v460 = vld [vmem:[#allocation7 + $0x110] sm:$0xff]
        %v461 = vld [vmem:[#allocation7 + $0x118] sm:$0xff]
        %v462 = vld [vmem:[#allocation7 + $0x120] sm:$0xff]
        %v463 = vld [vmem:[#allocation7 + $0x128] sm:$0xff]
        %v464 = vld [vmem:[#allocation7 + $0x130] sm:$0xff]
        %v465 = vld [vmem:[#allocation7 + $0x138] sm:$0xff]
        %v466 = vld [vmem:[#allocation7 + $0x140] sm:$0xff]
        %v467 = vld [vmem:[#allocation7 + $0x148] sm:$0xff]
        %v468 = vld [vmem:[#allocation7 + $0x150] sm:$0xff]
        %v469 = vld [vmem:[#allocation7 + $0x158] sm:$0xff]
        %v470 = vld [vmem:[#allocation7 + $0x160] sm:$0xff]
        %v471 = vld [vmem:[#allocation7 + $0x168] sm:$0xff]
        %v472 = vld [vmem:[#allocation7 + $0x170] sm:$0xff]
        %v473 = vld [vmem:[#allocation7 + $0x178] sm:$0xff]
        %v474 = vld [vmem:[#allocation7 + $0x180] sm:$0xff]
        %v475 = vld [vmem:[#allocation7 + $0x188] sm:$0xff]
        %v476 = vld [vmem:[#allocation7 + $0x190] sm:$0xff]
        %v477 = vld [vmem:[#allocation7 + $0x198] sm:$0xff]
        %v478 = vld [vmem:[#allocation7 + $0x1a0] sm:$0xff]
        %v479 = vld [vmem:[#allocation7 + $0x1a8] sm:$0xff]
        %v480 = vld [vmem:[#allocation7 + $0x1b0] sm:$0xff]
        %v481 = vld [vmem:[#allocation7 + $0x1b8] sm:$0xff]
        %v482 = vld [vmem:[#allocation7 + $0x1c0] sm:$0xff]
        %v483 = vld [vmem:[#allocation7 + $0x1c8] sm:$0xff]
        %v484 = vld [vmem:[#allocation7 + $0x1d0] sm:$0xff]
        %v485 = vld [vmem:[#allocation7 + $0x1d8] sm:$0xff]
        %v486 = vld [vmem:[#allocation7 + $0x1e0] sm:$0xff]
        %v487 = vld [vmem:[#allocation7 + $0x1e8] sm:$0xff]
        %v488 = vld [vmem:[#allocation7 + $0x1f0] sm:$0xff]
        %v489 = vld [vmem:[#allocation7 + $0x1f8] sm:$0xff]
        %v490 = vld [vmem:[%s4] sm:$0xf]
        %v492 = vlaneseq
        %v493 = vshrl.u32 %v492, 7
        %v494 = vsub.s32 0, %v493
        %v495 = vrot.slane %v490, %v494
        %v496 = vlaneseq
        %v497 = vshrl.u32 %v496, 7
        %v498 = vsub.s32 1, %v497
        %v499 = vrot.slane %v490, %v498
        %v500 = vlaneseq
        %v501 = vshrl.u32 %v500, 7
        %v502 = vsub.s32 2, %v501
        %v503 = vrot.slane %v490, %v502
        %v504 = vlaneseq
        %v505 = vshrl.u32 %v504, 7
        %v506 = vsub.s32 3, %v505
        %v507 = vrot.slane %v490, %v506
        %v576 = vunpack.c.l.b16 %v426
        %v577 = vunpack.c.h.b16 %v426
        %v578 = vunpack.c.l.b16 %v427
        %v579 = vunpack.c.h.b16 %v427
        %v580 = vunpack.c.l.b16 %v428
        %v581 = vunpack.c.h.b16 %v428
        %v582 = vunpack.c.l.b16 %v429
        %v583 = vunpack.c.h.b16 %v429
        %v584 = vunpack.c.l.b16 %v430
        %v585 = vunpack.c.h.b16 %v430
        %v586 = vunpack.c.l.b16 %v431
        %v587 = vunpack.c.h.b16 %v431
        %v588 = vunpack.c.l.b16 %v432
        %v589 = vunpack.c.h.b16 %v432
        %v590 = vunpack.c.l.b16 %v433
        %v591 = vunpack.c.h.b16 %v433
        %v592 = vunpack.c.l.b16 %v434
        %v593 = vunpack.c.h.b16 %v434
        %v594 = vunpack.c.l.b16 %v435
        %v595 = vunpack.c.h.b16 %v435
        %v596 = vunpack.c.l.b16 %v436
        %v597 = vunpack.c.h.b16 %v436
        %v598 = vunpack.c.l.b16 %v437
        %v599 = vunpack.c.h.b16 %v437
        %v600 = vunpack.c.l.b16 %v438
        %v601 = vunpack.c.h.b16 %v438
        %v602 = vunpack.c.l.b16 %v439
        %v603 = vunpack.c.h.b16 %v439
        %v604 = vunpack.c.l.b16 %v440
        %v605 = vunpack.c.h.b16 %v440
        %v606 = vunpack.c.l.b16 %v441
        %v607 = vunpack.c.h.b16 %v441
        %v608 = vunpack.c.l.b16 %v442
        %v609 = vunpack.c.h.b16 %v442
        %v610 = vunpack.c.l.b16 %v443
        %v611 = vunpack.c.h.b16 %v443
        %v612 = vunpack.c.l.b16 %v444
        %v613 = vunpack.c.h.b16 %v444
        %v614 = vunpack.c.l.b16 %v445
        %v615 = vunpack.c.h.b16 %v445
        %v616 = vunpack.c.l.b16 %v446
        %v617 = vunpack.c.h.b16 %v446
        %v618 = vunpack.c.l.b16 %v447
        %v619 = vunpack.c.h.b16 %v447
        %v620 = vunpack.c.l.b16 %v448
        %v621 = vunpack.c.h.b16 %v448
        %v622 = vunpack.c.l.b16 %v449
        %v623 = vunpack.c.h.b16 %v449
        %v624 = vunpack.c.l.b16 %v450
        %v625 = vunpack.c.h.b16 %v450
        %v626 = vunpack.c.l.b16 %v451
        %v627 = vunpack.c.h.b16 %v451
        %v628 = vunpack.c.l.b16 %v452
        %v629 = vunpack.c.h.b16 %v452
        %v630 = vunpack.c.l.b16 %v453
        %v631 = vunpack.c.h.b16 %v453
        %v632 = vunpack.c.l.b16 %v454
        %v633 = vunpack.c.h.b16 %v454
        %v634 = vunpack.c.l.b16 %v455
        %v635 = vunpack.c.h.b16 %v455
        %v636 = vunpack.c.l.b16 %v456
        %v637 = vunpack.c.h.b16 %v456
        %v638 = vunpack.c.l.b16 %v457
        %v639 = vunpack.c.h.b16 %v457
        %v640 = vunpack.c.l.b16 %v458
        %v641 = vunpack.c.h.b16 %v458
        %v642 = vunpack.c.l.b16 %v459
        %v643 = vunpack.c.h.b16 %v459
        %v644 = vunpack.c.l.b16 %v460
        %v645 = vunpack.c.h.b16 %v460
        %v646 = vunpack.c.l.b16 %v461
        %v647 = vunpack.c.h.b16 %v461
        %v648 = vunpack.c.l.b16 %v462
        %v649 = vunpack.c.h.b16 %v462
        %v650 = vunpack.c.l.b16 %v463
        %v651 = vunpack.c.h.b16 %v463
        %v652 = vunpack.c.l.b16 %v464
        %v653 = vunpack.c.h.b16 %v464
        %v654 = vunpack.c.l.b16 %v465
        %v655 = vunpack.c.h.b16 %v465
        %v656 = vunpack.c.l.b16 %v466
        %v657 = vunpack.c.h.b16 %v466
        %v658 = vunpack.c.l.b16 %v467
        %v659 = vunpack.c.h.b16 %v467
        %v660 = vunpack.c.l.b16 %v468
        %v661 = vunpack.c.h.b16 %v468
        %v662 = vunpack.c.l.b16 %v469
        %v663 = vunpack.c.h.b16 %v469
        %v664 = vunpack.c.l.b16 %v470
        %v665 = vunpack.c.h.b16 %v470
        %v666 = vunpack.c.l.b16 %v471
        %v667 = vunpack.c.h.b16 %v471
        %v668 = vunpack.c.l.b16 %v472
        %v669 = vunpack.c.h.b16 %v472
        %v670 = vunpack.c.l.b16 %v473
        %v671 = vunpack.c.h.b16 %v473
        %v672 = vunpack.c.l.b16 %v474
        %v673 = vunpack.c.h.b16 %v474
        %v674 = vunpack.c.l.b16 %v475
        %v675 = vunpack.c.h.b16 %v475
        %v676 = vunpack.c.l.b16 %v476
        %v677 = vunpack.c.h.b16 %v476
        %v678 = vunpack.c.l.b16 %v477
        %v679 = vunpack.c.h.b16 %v477
        %v680 = vunpack.c.l.b16 %v478
        %v681 = vunpack.c.h.b16 %v478
        %v682 = vunpack.c.l.b16 %v479
        %v683 = vunpack.c.h.b16 %v479
        %v684 = vunpack.c.l.b16 %v480
        %v685 = vunpack.c.h.b16 %v480
        %v686 = vunpack.c.l.b16 %v481
        %v687 = vunpack.c.h.b16 %v481
        %v688 = vunpack.c.l.b16 %v482
        %v689 = vunpack.c.h.b16 %v482
        %v690 = vunpack.c.l.b16 %v483
        %v691 = vunpack.c.h.b16 %v483
        %v692 = vunpack.c.l.b16 %v484
        %v693 = vunpack.c.h.b16 %v484
        %v694 = vunpack.c.l.b16 %v485
        %v695 = vunpack.c.h.b16 %v485
        %v696 = vunpack.c.l.b16 %v486
        %v697 = vunpack.c.h.b16 %v486
        %v698 = vunpack.c.l.b16 %v487
        %v699 = vunpack.c.h.b16 %v487
        %v700 = vunpack.c.l.b16 %v488
        %v701 = vunpack.c.h.b16 %v488
        %v702 = vunpack.c.l.b16 %v489
        %v703 = vunpack.c.h.b16 %v489
        %v704 = vpack.c.b16 %v580, %v576
        %v705 = vpack.c.b16 %v581, %v577
        %v706 = vpack.c.b16 %v582, %v578
        %v707 = vpack.c.b16 %v583, %v579
        %v708 = vpack.c.b16 %v588, %v584
        %v709 = vpack.c.b16 %v589, %v585
        %v710 = vpack.c.b16 %v590, %v586
        %v711 = vpack.c.b16 %v591, %v587
        %v712 = vpack.c.b16 %v596, %v592
        %v713 = vpack.c.b16 %v597, %v593
        %v714 = vpack.c.b16 %v598, %v594
        %v715 = vpack.c.b16 %v599, %v595
        %v716 = vpack.c.b16 %v604, %v600
        %v717 = vpack.c.b16 %v605, %v601
        %v718 = vpack.c.b16 %v606, %v602
        %v719 = vpack.c.b16 %v607, %v603
        %v720 = vpack.c.b16 %v612, %v608
        %v721 = vpack.c.b16 %v613, %v609
        %v722 = vpack.c.b16 %v614, %v610
        %v723 = vpack.c.b16 %v615, %v611
        %v724 = vpack.c.b16 %v620, %v616
        %v725 = vpack.c.b16 %v621, %v617
        %v726 = vpack.c.b16 %v622, %v618
        %v727 = vpack.c.b16 %v623, %v619
        %v728 = vpack.c.b16 %v628, %v624
        %v729 = vpack.c.b16 %v629, %v625
        %v730 = vpack.c.b16 %v630, %v626
        %v731 = vpack.c.b16 %v631, %v627
        %v732 = vpack.c.b16 %v636, %v632
        %v733 = vpack.c.b16 %v637, %v633
        %v734 = vpack.c.b16 %v638, %v634
        %v735 = vpack.c.b16 %v639, %v635
        %v736 = vpack.c.b16 %v644, %v640
        %v737 = vpack.c.b16 %v645, %v641
        %v738 = vpack.c.b16 %v646, %v642
        %v739 = vpack.c.b16 %v647, %v643
        %v740 = vpack.c.b16 %v652, %v648
        %v741 = vpack.c.b16 %v653, %v649
        %v742 = vpack.c.b16 %v654, %v650
        %v743 = vpack.c.b16 %v655, %v651
        %v744 = vpack.c.b16 %v660, %v656
        %v745 = vpack.c.b16 %v661, %v657
        %v746 = vpack.c.b16 %v662, %v658
        %v747 = vpack.c.b16 %v663, %v659
        %v748 = vpack.c.b16 %v668, %v664
        %v749 = vpack.c.b16 %v669, %v665
        %v750 = vpack.c.b16 %v670, %v666
        %v751 = vpack.c.b16 %v671, %v667
        %v752 = vpack.c.b16 %v676, %v672
        %v753 = vpack.c.b16 %v677, %v673
        %v754 = vpack.c.b16 %v678, %v674
        %v755 = vpack.c.b16 %v679, %v675
        %v756 = vpack.c.b16 %v684, %v680
        %v757 = vpack.c.b16 %v685, %v681
        %v758 = vpack.c.b16 %v686, %v682
        %v759 = vpack.c.b16 %v687, %v683
        %v760 = vpack.c.b16 %v692, %v688
        %v761 = vpack.c.b16 %v693, %v689
        %v762 = vpack.c.b16 %v694, %v690
        %v763 = vpack.c.b16 %v695, %v691
        %v764 = vpack.c.b16 %v700, %v696
        %v765 = vpack.c.b16 %v701, %v697
        %v766 = vpack.c.b16 %v702, %v698
        %v767 = vpack.c.b16 %v703, %v699
        %832 = vmatprep.subr.bf16.mxu0 %v705
        %833 = vmatpush1.bf16.msra.mxu0 %v704
        %834 = vmatprep.subr.bf16.mxu0 %v709
        %835 = vmatpush1.bf16.msra.mxu0 %v708
        %836 = vmatprep.subr.bf16.mxu0 %v713
        %837 = vmatpush1.bf16.msra.mxu0 %v712
        %838 = vmatprep.subr.bf16.mxu0 %v717
        %839 = vmatpush1.bf16.msra.mxu0 %v716
        %840 = vmatprep.subr.bf16.mxu0 %v721
        %841 = vmatpush1.bf16.msra.mxu0 %v720
        %842 = vmatprep.subr.bf16.mxu0 %v725
        %843 = vmatpush1.bf16.msra.mxu0 %v724
        %844 = vmatprep.subr.bf16.mxu0 %v729
        %845 = vmatpush1.bf16.msra.mxu0 %v728
        %846 = vmatprep.subr.bf16.mxu0 %v733
        %847 = vmatpush1.bf16.msra.mxu0 %v732
        %848 = vmatprep.subr.bf16.mxu0 %v737
        %849 = vmatpush1.bf16.msra.mxu0 %v736
        %850 = vmatprep.subr.bf16.mxu0 %v741
        %851 = vmatpush1.bf16.msra.mxu0 %v740
        %852 = vmatprep.subr.bf16.mxu0 %v745
        %853 = vmatpush1.bf16.msra.mxu0 %v744
        %854 = vmatprep.subr.bf16.mxu0 %v749
        %855 = vmatpush1.bf16.msra.mxu0 %v748
        %856 = vmatprep.subr.bf16.mxu0 %v753
        %857 = vmatpush1.bf16.msra.mxu0 %v752
        %858 = vmatprep.subr.bf16.mxu0 %v757
        %859 = vmatpush1.bf16.msra.mxu0 %v756
        %860 = vmatprep.subr.bf16.mxu0 %v761
        %861 = vmatpush1.bf16.msra.mxu0 %v760
        %862 = vmatprep.subr.bf16.mxu0 %v765
        %863 = vmatpush1.bf16.msra.mxu0 %v764
        %864 = vmatprep.mubr.bf16.mxu0 %v425
        %865 = vmatmul.mubr.bf16.gmra.mrb[0].mxu0 %v424
        %v866 = vpop.f32.mrb[0].mxu0
        %v867 = vadd.f32 %v495, %v866
        %v868 = vpop.f32.mrb[0].mxu0
        %v869 = vadd.f32 %v499, %v868
        %v870 = vpop.f32.mrb[0].mxu0
        %v871 = vpop.f32.mrb[0].mxu0
        %872 = vdwg.mxu0
        %873 = vmatprep.subr.bf16.mxu0 %v707
        %874 = vmatpush1.bf16.msra.mxu0 %v706
        %875 = vmatprep.subr.bf16.mxu0 %v711
        %876 = vmatpush1.bf16.msra.mxu0 %v710
        %877 = vmatprep.subr.bf16.mxu0 %v715
        %878 = vmatpush1.bf16.msra.mxu0 %v714
        %879 = vmatprep.subr.bf16.mxu0 %v719
        %880 = vmatpush1.bf16.msra.mxu0 %v718
        %881 = vmatprep.subr.bf16.mxu0 %v723
        %882 = vmatpush1.bf16.msra.mxu0 %v722
        %883 = vmatprep.subr.bf16.mxu0 %v727
        %884 = vmatpush1.bf16.msra.mxu0 %v726
        %885 = vmatprep.subr.bf16.mxu0 %v731
        %886 = vmatpush1.bf16.msra.mxu0 %v730
        %887 = vmatprep.subr.bf16.mxu0 %v735
        %888 = vmatpush1.bf16.msra.mxu0 %v734
        %889 = vmatprep.subr.bf16.mxu0 %v739
        %890 = vmatpush1.bf16.msra.mxu0 %v738
        %891 = vmatprep.subr.bf16.mxu0 %v743
        %892 = vmatpush1.bf16.msra.mxu0 %v742
        %893 = vmatprep.subr.bf16.mxu0 %v747
        %894 = vmatpush1.bf16.msra.mxu0 %v746
        %895 = vmatprep.subr.bf16.mxu0 %v751
        %896 = vmatpush1.bf16.msra.mxu0 %v750
        %897 = vmatprep.subr.bf16.mxu0 %v755
        %898 = vmatpush1.bf16.msra.mxu0 %v754
        %899 = vmatprep.subr.bf16.mxu0 %v759
        %900 = vmatpush1.bf16.msra.mxu0 %v758
        %901 = vmatprep.subr.bf16.mxu0 %v763
        %902 = vmatpush1.bf16.msra.mxu0 %v762
        %903 = vmatprep.subr.bf16.mxu0 %v767
        %904 = vmatpush1.bf16.msra.mxu0 %v766
        %905 = vmatprep.mubr.bf16.mxu0 %v425
        %906 = vmatmul.mubr.bf16.gmra.mrb[0].mxu0 %v424
        %v907 = vpop.f32.mrb[0].mxu0
        %v908 = vadd.f32 %v503, %v907
        %v909 = vpop.f32.mrb[0].mxu0
        %v910 = vadd.f32 %v507, %v909
        %v911 = vpop.f32.mrb[0].mxu0
        %v912 = vpop.f32.mrb[0].mxu0
        %913 = vdwg.mxu0
        %v914 = vmax.f32 %v867, 0.0
        %v915 = vmax.f32 %v869, 0.0
        %v916 = vmax.f32 %v908, 0.0
        %v917 = vmax.f32 %v910, 0.0
        %v918 = vpack.c.bf16 %v914, %v914
        %v919 = vpack.c.bf16 %v915, %v915
        %v920 = vpack.c.bf16 %v916, %v916
        %v921 = vpack.c.bf16 %v917, %v917
        %v922 = vld [vmem:[#allocation8] sm:$0xf]
        %v923 = vld [vmem:[#allocation8 + $0x4] sm:$0xf]
        %v924 = vld [vmem:[#allocation8 + $0x8] sm:$0xf]
        %v925 = vld [vmem:[#allocation8 + $0xc] sm:$0xf]
        %v926 = vld [vmem:[#allocation8 + $0x10] sm:$0xf]
        %v927 = vld [vmem:[#allocation8 + $0x14] sm:$0xf]
        %v928 = vld [vmem:[#allocation8 + $0x18] sm:$0xf]
        %v929 = vld [vmem:[#allocation8 + $0x1c] sm:$0xf]
        %v930 = vld [vmem:[#allocation8 + $0x20] sm:$0xf]
        %v931 = vld [vmem:[#allocation8 + $0x24] sm:$0xf]
        %v932 = vld [vmem:[#allocation8 + $0x28] sm:$0xf]
        %v933 = vld [vmem:[#allocation8 + $0x2c] sm:$0xf]
        %v934 = vld [vmem:[#allocation8 + $0x30] sm:$0xf]
        %v935 = vld [vmem:[#allocation8 + $0x34] sm:$0xf]
        %v936 = vld [vmem:[#allocation8 + $0x38] sm:$0xf]
        %v937 = vld [vmem:[#allocation8 + $0x3c] sm:$0xf]
        %v938 = vld [vmem:[#allocation8 + $0x40] sm:$0xf]
        %v939 = vld [vmem:[#allocation8 + $0x44] sm:$0xf]
        %v940 = vld [vmem:[#allocation8 + $0x48] sm:$0xf]
        %v941 = vld [vmem:[#allocation8 + $0x4c] sm:$0xf]
        %v942 = vld [vmem:[#allocation8 + $0x50] sm:$0xf]
        %v943 = vld [vmem:[#allocation8 + $0x54] sm:$0xf]
        %v944 = vld [vmem:[#allocation8 + $0x58] sm:$0xf]
        %v945 = vld [vmem:[#allocation8 + $0x5c] sm:$0xf]
        %v946 = vld [vmem:[#allocation8 + $0x60] sm:$0xf]
        %v947 = vld [vmem:[#allocation8 + $0x64] sm:$0xf]
        %v948 = vld [vmem:[#allocation8 + $0x68] sm:$0xf]
        %v949 = vld [vmem:[#allocation8 + $0x6c] sm:$0xf]
        %v950 = vld [vmem:[#allocation8 + $0x70] sm:$0xf]
        %v951 = vld [vmem:[#allocation8 + $0x74] sm:$0xf]
        %v952 = vld [vmem:[#allocation8 + $0x78] sm:$0xf]
        %v953 = vld [vmem:[#allocation8 + $0x7c] sm:$0xf]
        %v954 = vld [vmem:[#allocation8 + $0x80] sm:$0xf]
        %v955 = vld [vmem:[#allocation8 + $0x84] sm:$0xf]
        %v956 = vld [vmem:[#allocation8 + $0x88] sm:$0xf]
        %v957 = vld [vmem:[#allocation8 + $0x8c] sm:$0xf]
        %v958 = vld [vmem:[#allocation8 + $0x90] sm:$0xf]
        %v959 = vld [vmem:[#allocation8 + $0x94] sm:$0xf]
        %v960 = vld [vmem:[#allocation8 + $0x98] sm:$0xf]
        %v961 = vld [vmem:[#allocation8 + $0x9c] sm:$0xf]
        %v962 = vld [vmem:[#allocation8 + $0xa0] sm:$0xf]
        %v963 = vld [vmem:[#allocation8 + $0xa4] sm:$0xf]
        %v964 = vld [vmem:[#allocation8 + $0xa8] sm:$0xf]
        %v965 = vld [vmem:[#allocation8 + $0xac] sm:$0xf]
        %v966 = vld [vmem:[#allocation8 + $0xb0] sm:$0xf]
        %v967 = vld [vmem:[#allocation8 + $0xb4] sm:$0xf]
        %v968 = vld [vmem:[#allocation8 + $0xb8] sm:$0xf]
        %v969 = vld [vmem:[#allocation8 + $0xbc] sm:$0xf]
        %v970 = vld [vmem:[#allocation8 + $0xc0] sm:$0xf]
        %v971 = vld [vmem:[#allocation8 + $0xc4] sm:$0xf]
        %v972 = vld [vmem:[#allocation8 + $0xc8] sm:$0xf]
        %v973 = vld [vmem:[#allocation8 + $0xcc] sm:$0xf]
        %v974 = vld [vmem:[#allocation8 + $0xd0] sm:$0xf]
        %v975 = vld [vmem:[#allocation8 + $0xd4] sm:$0xf]
        %v976 = vld [vmem:[#allocation8 + $0xd8] sm:$0xf]
        %v977 = vld [vmem:[#allocation8 + $0xdc] sm:$0xf]
        %v978 = vld [vmem:[#allocation8 + $0xe0] sm:$0xf]
        %v979 = vld [vmem:[#allocation8 + $0xe4] sm:$0xf]
        %v980 = vld [vmem:[#allocation8 + $0xe8] sm:$0xf]
        %v981 = vld [vmem:[#allocation8 + $0xec] sm:$0xf]
        %v982 = vld [vmem:[#allocation8 + $0xf0] sm:$0xf]
        %v983 = vld [vmem:[#allocation8 + $0xf4] sm:$0xf]
        %v984 = vld [vmem:[#allocation8 + $0xf8] sm:$0xf]
        %v985 = vld [vmem:[#allocation8 + $0xfc] sm:$0xf]
        %v986 = vld [vmem:[%s6] sm:$0x1]
        %v988 = vlaneseq
        %v989 = vshrl.u32 %v988, 7
        %v990 = vsub.s32 0, %v989
        %v991 = vrot.slane %v986, %v990
        %v1057 = vunpack.c.l.b16 %v922
        %v1058 = vunpack.c.l.b16 %v923
        %v1059 = vunpack.c.l.b16 %v924
        %v1060 = vunpack.c.l.b16 %v925
        %v1061 = vunpack.c.l.b16 %v926
        %v1062 = vunpack.c.l.b16 %v927
        %v1063 = vunpack.c.l.b16 %v928
        %v1064 = vunpack.c.l.b16 %v929
        %v1065 = vunpack.c.l.b16 %v930
        %v1066 = vunpack.c.l.b16 %v931
        %v1067 = vunpack.c.l.b16 %v932
        %v1068 = vunpack.c.l.b16 %v933
        %v1069 = vunpack.c.l.b16 %v934
        %v1070 = vunpack.c.l.b16 %v935
        %v1071 = vunpack.c.l.b16 %v936
        %v1072 = vunpack.c.l.b16 %v937
        %v1073 = vunpack.c.l.b16 %v938
        %v1074 = vunpack.c.l.b16 %v939
        %v1075 = vunpack.c.l.b16 %v940
        %v1076 = vunpack.c.l.b16 %v941
        %v1077 = vunpack.c.l.b16 %v942
        %v1078 = vunpack.c.l.b16 %v943
        %v1079 = vunpack.c.l.b16 %v944
        %v1080 = vunpack.c.l.b16 %v945
        %v1081 = vunpack.c.l.b16 %v946
        %v1082 = vunpack.c.l.b16 %v947
        %v1083 = vunpack.c.l.b16 %v948
        %v1084 = vunpack.c.l.b16 %v949
        %v1085 = vunpack.c.l.b16 %v950
        %v1086 = vunpack.c.l.b16 %v951
        %v1087 = vunpack.c.l.b16 %v952
        %v1088 = vunpack.c.l.b16 %v953
        %v1089 = vunpack.c.l.b16 %v954
        %v1090 = vunpack.c.l.b16 %v955
        %v1091 = vunpack.c.l.b16 %v956
        %v1092 = vunpack.c.l.b16 %v957
        %v1093 = vunpack.c.l.b16 %v958
        %v1094 = vunpack.c.l.b16 %v959
        %v1095 = vunpack.c.l.b16 %v960
        %v1096 = vunpack.c.l.b16 %v961
        %v1097 = vunpack.c.l.b16 %v962
        %v1098 = vunpack.c.l.b16 %v963
        %v1099 = vunpack.c.l.b16 %v964
        %v1100 = vunpack.c.l.b16 %v965
        %v1101 = vunpack.c.l.b16 %v966
        %v1102 = vunpack.c.l.b16 %v967
        %v1103 = vunpack.c.l.b16 %v968
        %v1104 = vunpack.c.l.b16 %v969
        %v1105 = vunpack.c.l.b16 %v970
        %v1106 = vunpack.c.l.b16 %v971
        %v1107 = vunpack.c.l.b16 %v972
        %v1108 = vunpack.c.l.b16 %v973
        %v1109 = vunpack.c.l.b16 %v974
        %v1110 = vunpack.c.l.b16 %v975
        %v1111 = vunpack.c.l.b16 %v976
        %v1112 = vunpack.c.l.b16 %v977
        %v1113 = vunpack.c.l.b16 %v978
        %v1114 = vunpack.c.l.b16 %v979
        %v1115 = vunpack.c.l.b16 %v980
        %v1116 = vunpack.c.l.b16 %v981
        %v1117 = vunpack.c.l.b16 %v982
        %v1118 = vunpack.c.l.b16 %v983
        %v1119 = vunpack.c.l.b16 %v984
        %v1120 = vunpack.c.l.b16 %v985
        %v1121 = vpack.c.b16 %v1058, %v1057
        %v1122 = vpack.c.b16 %v1060, %v1059
        %v1123 = vpack.c.b16 %v1062, %v1061
        %v1124 = vpack.c.b16 %v1064, %v1063
        %v1125 = vpack.c.b16 %v1066, %v1065
        %v1126 = vpack.c.b16 %v1068, %v1067
        %v1127 = vpack.c.b16 %v1070, %v1069
        %v1128 = vpack.c.b16 %v1072, %v1071
        %v1129 = vpack.c.b16 %v1074, %v1073
        %v1130 = vpack.c.b16 %v1076, %v1075
        %v1131 = vpack.c.b16 %v1078, %v1077
        %v1132 = vpack.c.b16 %v1080, %v1079
        %v1133 = vpack.c.b16 %v1082, %v1081
        %v1134 = vpack.c.b16 %v1084, %v1083
        %v1135 = vpack.c.b16 %v1086, %v1085
        %v1136 = vpack.c.b16 %v1088, %v1087
        %v1137 = vpack.c.b16 %v1090, %v1089
        %v1138 = vpack.c.b16 %v1092, %v1091
        %v1139 = vpack.c.b16 %v1094, %v1093
        %v1140 = vpack.c.b16 %v1096, %v1095
        %v1141 = vpack.c.b16 %v1098, %v1097
        %v1142 = vpack.c.b16 %v1100, %v1099
        %v1143 = vpack.c.b16 %v1102, %v1101
        %v1144 = vpack.c.b16 %v1104, %v1103
        %v1145 = vpack.c.b16 %v1106, %v1105
        %v1146 = vpack.c.b16 %v1108, %v1107
        %v1147 = vpack.c.b16 %v1110, %v1109
        %v1148 = vpack.c.b16 %v1112, %v1111
        %v1149 = vpack.c.b16 %v1114, %v1113
        %v1150 = vpack.c.b16 %v1116, %v1115
        %v1151 = vpack.c.b16 %v1118, %v1117
        %v1152 = vpack.c.b16 %v1120, %v1119
        %1185 = vmatprep.subr.bf16.mxu0 0
        %1186 = vmatpush1.bf16.msra.mxu0 %v1121
        %1187 = vmatprep.subr.bf16.mxu0 0
        %1188 = vmatpush1.bf16.msra.mxu0 %v1122
        %1189 = vmatprep.subr.bf16.mxu0 0
        %1190 = vmatpush1.bf16.msra.mxu0 %v1123
        %1191 = vmatprep.subr.bf16.mxu0 0
        %1192 = vmatpush1.bf16.msra.mxu0 %v1124
        %1193 = vmatprep.subr.bf16.mxu0 0
        %1194 = vmatpush1.bf16.msra.mxu0 %v1125
        %1195 = vmatprep.subr.bf16.mxu0 0
        %1196 = vmatpush1.bf16.msra.mxu0 %v1126
        %1197 = vmatprep.subr.bf16.mxu0 0
        %1198 = vmatpush1.bf16.msra.mxu0 %v1127
        %1199 = vmatprep.subr.bf16.mxu0 0
        %1200 = vmatpush1.bf16.msra.mxu0 %v1128
        %1201 = vmatprep.subr.bf16.mxu0 0
        %1202 = vmatpush1.bf16.msra.mxu0 %v1129
        %1203 = vmatprep.subr.bf16.mxu0 0
        %1204 = vmatpush1.bf16.msra.mxu0 %v1130
        %1205 = vmatprep.subr.bf16.mxu0 0
        %1206 = vmatpush1.bf16.msra.mxu0 %v1131
        %1207 = vmatprep.subr.bf16.mxu0 0
        %1208 = vmatpush1.bf16.msra.mxu0 %v1132
        %1209 = vmatprep.subr.bf16.mxu0 0
        %1210 = vmatpush1.bf16.msra.mxu0 %v1133
        %1211 = vmatprep.subr.bf16.mxu0 0
        %1212 = vmatpush1.bf16.msra.mxu0 %v1134
        %1213 = vmatprep.subr.bf16.mxu0 0
        %1214 = vmatpush1.bf16.msra.mxu0 %v1135
        %1215 = vmatprep.subr.bf16.mxu0 0
        %1216 = vmatpush1.bf16.msra.mxu0 %v1136
        %1217 = vmatprep.mubr.bf16.mxu0 %v919
        %1218 = vmatmul.mubr.bf16.gmra.mrb[0].mxu0 %v918
        %v1219 = vpop.f32.mrb[0].mxu0
        %v1220 = vadd.f32 %v991, %v1219
        %v1221 = vpop.f32.mrb[0].mxu0
        %v1222 = vpop.f32.mrb[0].mxu0
        %v1223 = vpop.f32.mrb[0].mxu0
        %1224 = vdwg.mxu0
        %1225 = vmatprep.subr.bf16.mxu0 0
        %1226 = vmatpush1.bf16.msra.mxu0 %v1137
        %1227 = vmatprep.subr.bf16.mxu0 0
        %1228 = vmatpush1.bf16.msra.mxu0 %v1138
        %1229 = vmatprep.subr.bf16.mxu0 0
        %1230 = vmatpush1.bf16.msra.mxu0 %v1139
        %1231 = vmatprep.subr.bf16.mxu0 0
        %1232 = vmatpush1.bf16.msra.mxu0 %v1140
        %1233 = vmatprep.subr.bf16.mxu0 0
        %1234 = vmatpush1.bf16.msra.mxu0 %v1141
        %1235 = vmatprep.subr.bf16.mxu0 0
        %1236 = vmatpush1.bf16.msra.mxu0 %v1142
        %1237 = vmatprep.subr.bf16.mxu0 0
        %1238 = vmatpush1.bf16.msra.mxu0 %v1143
        %1239 = vmatprep.subr.bf16.mxu0 0
        %1240 = vmatpush1.bf16.msra.mxu0 %v1144
        %1241 = vmatprep.subr.bf16.mxu0 0
        %1242 = vmatpush1.bf16.msra.mxu0 %v1145
        %1243 = vmatprep.subr.bf16.mxu0 0
        %1244 = vmatpush1.bf16.msra.mxu0 %v1146
        %1245 = vmatprep.subr.bf16.mxu0 0
        %1246 = vmatpush1.bf16.msra.mxu0 %v1147
        %1247 = vmatprep.subr.bf16.mxu0 0
        %1248 = vmatpush1.bf16.msra.mxu0 %v1148
        %1249 = vmatprep.subr.bf16.mxu0 0
        %1250 = vmatpush1.bf16.msra.mxu0 %v1149
        %1251 = vmatprep.subr.bf16.mxu0 0
        %1252 = vmatpush1.bf16.msra.mxu0 %v1150
        %1253 = vmatprep.subr.bf16.mxu0 0
        %1254 = vmatpush1.bf16.msra.mxu0 %v1151
        %1255 = vmatprep.subr.bf16.mxu0 0
        %1256 = vmatpush1.bf16.msra.mxu0 %v1152
        %1257 = vmatprep.mubr.bf16.mxu0 %v921
        %1258 = vmatmul.mubr.bf16.gmra.mrb[0].mxu0 %v920
        %v1259 = vpop.f32.mrb[0].mxu0
        %v1260 = vadd.f32 %v1220, %v1259
        %v1261 = vpop.f32.mrb[0].mxu0
        %v1262 = vpop.f32.mrb[0].mxu0
        %v1263 = vpop.f32.mrb[0].mxu0
        %1264 = vdwg.mxu0
        %1265 = vst [vmem:[%s337] sm:$0xff] %v1260
        %s1266 = sand.u32 %s186, 1
        %s1267 = scalar_lea.sflag [#allocation4], %s1266
        %s1268 = sand.u32 %s186, 1
        %s1269 = smul.addr %s1268, 8
        %s1270 = scalar_lea.vmem [#allocation10], %s1269
        // Predicated region
        $region65: #{tpu_custom_call.1} parent=47 // pred_check
          %p1271 = pneg %p196
        $region66: #{tpu_custom_call.1} parent=47 // pred_check_branch
          %1273 = sbr.rel (%p1271) target = $region68
        $region67: #{tpu_custom_call.1} parent=47 // pred_region
          %s1275 = ssub.s32 128, 128
          %1276 = vsyncadd %s1267, %s1275
          %s1277 = smul.addr %s26, 128
          %s1278 = scalar_lea.hbm %s7, %s1277
          %s1280 = sshll.u32 %s1270, 4
          %s1281 = int_to_ptr.vmem [resolvable:$true] %s1280
          %1283 = dma.vmem_to_hbm [thread:$0]  %s1281, 128, %s1278, %s1267
        $region68: #{tpu_custom_call.1} parent=47 // pred_fallthru
          _
      $region48: #{tpu_custom_call.1} parent=5 // pred_fallthru
        _
      %p1284 = scmp.le.s32.totalorder 2, %s21
      // Predicated region
      $region69: #{tpu_custom_call.1} parent=5 // pred_check
        %p1285 = pneg %p1284
      $region70: #{tpu_custom_call.1} parent=5 // pred_check_branch
        %1287 = sbr.rel (%p1285) target = $region72
      $region71: #{tpu_custom_call.1} parent=5 // pred_region
        %s1288 = ssub.s32 %s21, 2
        // Predicated region
        $region73: #{tpu_custom_call.1} parent=71 // pred_check
          %p1289 = pneg %p202
        $region74: #{tpu_custom_call.1} parent=71 // pred_check_branch
          %1291 = sbr.rel (%p1289) target = $region76
        $region75: #{tpu_custom_call.1} parent=71 // pred_region
          %s1292 = sand.u32 %s187, 1
          %s1293 = scalar_lea.sflag [#allocation4], %s1292
          %s1294 = sand.u32 %s187, 1
          %s1295 = smul.addr %s1294, 8
          %s1296 = scalar_lea.vmem [#allocation10], %s1295
          %1297 = dma.done %s1293, 128
        $region76: #{tpu_custom_call.1} parent=71 // pred_fallthru
          _
      $region72: #{tpu_custom_call.1} parent=5 // pred_fallthru
        _
    $region6: #{tpu_custom_call.1} parent=1 // loop_footer
      %s25 = sadd.s32 1, %s21
    $region7: #{tpu_custom_call.1} parent=1 // loop_footer_branch
      %20 = sbr.rel target = $region3
    $region8: #{tpu_custom_call.1} parent=1 // loop_exit
      _
    %1298 = vsyncpa [#allocation3], 1
    %s1299 = scalar_lea.sflag [#allocation3], 1
    %1300 = vsyncpa %s1299, 1
    %1301 = vsyncpa [#allocation6], 1
    %1302 = vsyncpa [#allocation9], 1
    %1303 = vsyncpa [#allocation4], 1
    %s1304 = scalar_lea.sflag [#allocation4], 1
    %1305 = vsyncpa %s1304, 1

</llo_original>
